<compile_context>
chip_gen: v7x
topology: tpu7x:2x2x1
jax: 0.10.0
libtpu: 0.0.40
codegen_flags: <defaults>
</compile_context>

<pallas_src>
import jax
import jax.numpy as jnp
from jax.experimental import pallas as pl
from jax.experimental.pallas import tpu as pltpu


def _round_up(n, m):
    return ((n + m - 1) // m) * m


def dnn_news_kernel(
    x_ref,
    w1_ref, b1_ref,
    w2_ref, b2_ref,
    w3_ref, b3_ref,
    w4_ref, b4_ref,
    w5t_ref, b5_ref,
    o_ref,
):
    """Fused DNN_News forward (eval) for one batch tile.

    Hidden block: relu(h @ W' + b') -> bf16, where W'/b' already absorb the previous
    layer's folded BatchNorm (eval running stats); Dropout is identity in eval.
    Final Linear is computed lane-major over batch: (O, K) @ (K, tile) -> (O, tile).
    """

    def block(h, w_ref, b_ref):
        # bf16 MXU matmul with f32 accumulation; bias + ReLU on the f32 VPU.
        h = jnp.dot(h, w_ref[...], preferred_element_type=jnp.float32) + b_ref[...]
        # bf16 inter-layer activations: halves VMEM round-trip, cast is needed anyway.
        return jnp.maximum(h, 0.0).astype(jnp.bfloat16)

    h = x_ref[...]                       # (tile, Fp) bf16
    h = block(h, w1_ref, b1_ref)
    h = block(h, w2_ref, b2_ref)
    h = block(h, w3_ref, b3_ref)
    h = block(h, w4_ref, b4_ref)         # (tile, 128) bf16

    # Final Linear, lane-major over batch.  The transpose of h rides the (otherwise idle)
    # XLU slot; the resulting (O, tile) store is lane-dense (batch on the lane axis).
    out = jnp.dot(w5t_ref[...], h.T, preferred_element_type=jnp.float32)
    o_ref[...] = (out + b5_ref[...]).astype(o_ref.dtype)


def fold_params(params, *, eps=1e-5):
    """Fold eval-mode BN of layer L into layer L+1's weights/bias; cast weights to bf16.

    forward(): x -> [Linear -> ReLU -> BN -> Dropout(eval=id)] x4 -> Linear.
    Since BN follows the ReLU, it is an affine map on the next Linear's input:
        W'_{L+1} = diag(s_L) @ W_{L+1},   b'_{L+1} = b_{L+1} + t_L @ W_{L+1}
    with s_L = gamma/sqrt(var+eps), t_L = beta - mean*s_L.
    """
    folded = {}
    s_prev = None
    t_prev = None
    for layer in range(1, 6):
        w = params[f"w{layer}"].astype(jnp.float32)          # (in, out)
        b = params[f"b{layer}"].astype(jnp.float32)          # (1, out)
        if s_prev is not None:
            b = b + t_prev @ w                               # uses the ORIGINAL W
            w = w * s_prev.reshape(-1, 1)                    # scale rows by s_prev
        if layer <= 4:
            gamma = params[f"gamma{layer}"]
            beta = params[f"beta{layer}"]
            mean = params[f"mean{layer}"]
            var = params[f"var{layer}"]
            s_prev = gamma / jnp.sqrt(var + eps)             # (1, out)
            t_prev = beta - mean * s_prev                    # (1, out)
            folded[f"w{layer}"] = w.astype(jnp.bfloat16)
            folded[f"b{layer}"] = b
        else:
            # Output layer stored transposed for the lane-major final matmul.
            folded["w5t"] = w.T.astype(jnp.bfloat16)         # (out, in)
            folded["b5"] = b.T                               # (out, 1)
    return folded


def dnn_news_forward(x, folded, *, batch_tile=None):
    """Run the fused DNN_News forward pass (eval semantics) with a Pallas TPU kernel.

    x: (B, input_size) float32.  folded: output of fold_params().
    Returns (B, output_size) float32.
    """
    B, F = x.shape
    O = folded["w5t"].shape[0]

    # --- feature padding: lane-dense x and full MXU K for layer 1 (v5e win) ---
    w1 = folded["w1"]
    Fp = _round_up(F, 128)
    if Fp != F:
        x = jnp.pad(x, ((0, 0), (0, Fp - F)))
        w1 = jnp.pad(w1, ((0, Fp - F), (0, 0)))

    # --- batch tiling ---
    if batch_tile is None:
        if B <= 256:
            batch_tile = _round_up(B, 8)                     # single tile
        else:
            # Big tiles (<=1024) amortize per-grid-step overhead, but keep >=2 grid
            # steps so v7x's two TensorCores both get work on the "parallel" axis.
            batch_tile = min(1024, _round_up(pl.cdiv(B, 2), 256))
    batch_tile = _round_up(batch_tile, 8)
    Bp = _round_up(B, batch_tile)
    if Bp != B:
        x = jnp.pad(x, ((0, Bp - B), (0, 0)))

    # Stream x in bf16 (halves the only large streaming HBM read); weights already bf16.
    x = x.astype(jnp.bfloat16)

    ordered = [
        w1, folded["b1"],
        folded["w2"], folded["b2"],
        folded["w3"], folded["b3"],
        folded["w4"], folded["b4"],
        folded["w5t"], folded["b5"],
    ]

    def full_spec(arr):
        # Constant block index -> operand stays VMEM-resident across grid steps (no re-DMA).
        nd = arr.ndim
        return pl.BlockSpec(arr.shape, lambda i, _nd=nd: (0,) * _nd)

    in_specs = [pl.BlockSpec((batch_tile, Fp), lambda i: (i, 0))]
    in_specs += [full_spec(a) for a in ordered]
    # Lane-major output: batch on the lane (last) axis -> lane-dense stores, no 128-wide
    # zero padding of the 1-wide output, and no extra padded-slice XLA pass afterwards.
    out_spec = pl.BlockSpec((O, batch_tile), lambda i: (0, i))

    out_om = pl.pallas_call(
        dnn_news_kernel,
        out_shape=jax.ShapeDtypeStruct((O, Bp), jnp.float32),
        grid_spec=pltpu.PrefetchScalarGridSpec(
            num_scalar_prefetch=0,
            grid=(Bp // batch_tile,),
            in_specs=in_specs,
            out_specs=out_spec,
        ),
        compiler_params=pltpu.CompilerParams(
            dimension_semantics=("parallel",),
        ),
    )(x, *ordered)

    # (O, Bp) -> (B, O): strip batch padding (garbage from zero-padded rows) and restore
    # the PyTorch (batch, out) layout.
    return out_om[:, :B].T


def make_params(key, input_size, hidden_sizes, output_size):
    """Deterministic synthetic parameters matching the PyTorch module (eval mode).

    Weights are stored transposed as (in, out) relative to nn.Linear's (out, in).
    """
    sizes = [input_size] + list(hidden_sizes) + [output_size]
    keys = iter(jax.random.split(key, 32))
    params = {}
    for layer in range(1, 6):
        fi, fo = sizes[layer - 1], sizes[layer]
        params[f"w{layer}"] = jax.random.normal(next(keys), (fi, fo), jnp.float32) * 0.05
        params[f"b{layer}"] = jax.random.normal(next(keys), (1, fo), jnp.float32) * 0.05
        if layer <= 4:
            params[f"gamma{layer}"] = 1.0 + 0.1 * jax.random.normal(next(keys), (1, fo), jnp.float32)
            params[f"beta{layer}"] = 0.1 * jax.random.normal(next(keys), (1, fo), jnp.float32)
            params[f"mean{layer}"] = 0.1 * jax.random.normal(next(keys), (1, fo), jnp.float32)
            params[f"var{layer}"] = 0.5 + jax.random.uniform(next(keys), (1, fo), jnp.float32)
    return params


def reference_forward_folded(x, folded):
    """Pure-JAX mirror of the kernel's folded bf16 math (tight check)."""
    h = x.astype(jnp.bfloat16)
    for layer in range(1, 5):
        h = jnp.dot(h, folded[f"w{layer}"], preferred_element_type=jnp.float32) + folded[f"b{layer}"]
        h = jnp.maximum(h, 0.0).astype(jnp.bfloat16)
    out = jnp.dot(h, folded["w5t"].T, preferred_element_type=jnp.float32)
    return out + folded["b5"].T


def reference_forward_f32(x, params, *, eps=1e-5):
    """Eval-mode PyTorch semantics in full f32 (loose check of the bf16 kernel)."""
    h = x
    for layer in range(1, 5):
        h = h @ params[f"w{layer}"] + params[f"b{layer}"]
        h = jnp.maximum(h, 0.0)
        s = params[f"gamma{layer}"] / jnp.sqrt(params[f"var{layer}"] + eps)
        h = (h - params[f"mean{layer}"]) * s + params[f"beta{layer}"]
        # Dropout(0.4) is identity in eval mode.
    return h @ params["w5"] + params["b5"]


if __name__ == "__main__":
    # Small shapes consistent with the module: an MLP over flat feature vectors.
    batch = 16
    input_size = 64
    hidden_sizes = [512, 512, 256, 128]
    output_size = 1

    key = jax.random.PRNGKey(0)
    kx, kp = jax.random.split(key)
    x = jax.random.normal(kx, (batch, input_size), jnp.float32)
    params = make_params(kp, input_size, hidden_sizes, output_size)
    folded = fold_params(params)

    out = dnn_news_forward(x, folded)
    out = jax.block_until_ready(out)
    assert out.shape == (batch, output_size), out.shape

    # Tight check against the kernel's own (folded, bf16-weight) math.
    ref_mirror = reference_forward_folded(x, folded)
    assert jnp.allclose(out, ref_mirror, atol=2e-3, rtol=2e-3), (
        float(jnp.max(jnp.abs(out - ref_mirror)))
    )

    # Loose check against full-f32 eval-mode PyTorch semantics (bf16 weight rounding).
    ref_f32 = reference_forward_f32(x, params)
    assert jnp.allclose(out, ref_f32, atol=5e-2, rtol=5e-2), (
        float(jnp.max(jnp.abs(out - ref_f32)))
    )

    print("KERNEL_OK")
</pallas_src>

<mosaic_0001>
module attributes {stable_mosaic.version = 11 : i64} {
  func.func @dnn_news_kernel(%arg0: i32, %arg1: memref<16x128xbf16, #tpu.memory_space<vmem>>, %arg2: memref<128x512xbf16, #tpu.memory_space<vmem>>, %arg3: memref<1x512xf32, #tpu.memory_space<vmem>>, %arg4: memref<512x512xbf16, #tpu.memory_space<vmem>>, %arg5: memref<1x512xf32, #tpu.memory_space<vmem>>, %arg6: memref<512x256xbf16, #tpu.memory_space<vmem>>, %arg7: memref<1x256xf32, #tpu.memory_space<vmem>>, %arg8: memref<256x128xbf16, #tpu.memory_space<vmem>>, %arg9: memref<1x128xf32, #tpu.memory_space<vmem>>, %arg10: memref<1x128xbf16, #tpu.memory_space<vmem>>, %arg11: memref<1x1xf32, #tpu.memory_space<vmem>>, %arg12: memref<1x16xf32, #tpu.memory_space<vmem>>) attributes {dimension_semantics = [#tpu.dimension_semantics<parallel>], iteration_bounds = array<i64: 1>, scalar_prefetch = 0 : i64, scratch_operands = 0 : i64, tpu.core_type = #tpu.core_type<tc>, window_params = [{transform_indices = @transform_0, window_bounds = array<i64: 16, 128>}, {pipeline_mode = #tpu.pipeline_mode<synchronous>, transform_indices = @transform_1, window_bounds = array<i64: 128, 512>}, {pipeline_mode = #tpu.pipeline_mode<synchronous>, transform_indices = @transform_2, window_bounds = array<i64: 1, 512>}, {pipeline_mode = #tpu.pipeline_mode<synchronous>, transform_indices = @transform_3, window_bounds = array<i64: 512, 512>}, {pipeline_mode = #tpu.pipeline_mode<synchronous>, transform_indices = @transform_4, window_bounds = array<i64: 1, 512>}, {pipeline_mode = #tpu.pipeline_mode<synchronous>, transform_indices = @transform_5, window_bounds = array<i64: 512, 256>}, {pipeline_mode = #tpu.pipeline_mode<synchronous>, transform_indices = @transform_6, window_bounds = array<i64: 1, 256>}, {pipeline_mode = #tpu.pipeline_mode<synchronous>, transform_indices = @transform_7, window_bounds = array<i64: 256, 128>}, {pipeline_mode = #tpu.pipeline_mode<synchronous>, transform_indices = @transform_8, window_bounds = array<i64: 1, 128>}, {pipeline_mode = #tpu.pipeline_mode<synchronous>, transform_indices = @transform_9, window_bounds = array<i64: 1, 128>}, {pipeline_mode = #tpu.pipeline_mode<synchronous>, transform_indices = @transform_10, window_bounds = array<i64: 1, 1>}, {transform_indices = @transform_11, window_bounds = array<i64: 1, 16>}]} {
    %c0 = arith.constant 0 : index
    %c0_0 = arith.constant 0 : index
    %0 = vector.load %arg1[%c0, %c0_0] : memref<16x128xbf16, #tpu.memory_space<vmem>>, vector<16x128xbf16>
    %c0_1 = arith.constant 0 : index
    %c0_2 = arith.constant 0 : index
    %1 = vector.load %arg2[%c0_1, %c0_2] : memref<128x512xbf16, #tpu.memory_space<vmem>>, vector<128x512xbf16>
    %cst = arith.constant dense<0.000000e+00> : vector<16x512xf32>
    %2 = tpu.matmul %0, %1, %cst {dimension_numbers = #tpu.dot_dimension_numbers<[1], [0], [0], [1], [0, 0, 1, 1], [], []>} : vector<16x128xbf16>, vector<128x512xbf16>, vector<16x512xf32> -> vector<16x512xf32>
    %c0_3 = arith.constant 0 : index
    %c0_4 = arith.constant 0 : index
    %3 = vector.load %arg3[%c0_3, %c0_4] : memref<1x512xf32, #tpu.memory_space<vmem>>, vector<1x512xf32>
    %4 = vector.broadcast %3 : vector<1x512xf32> to vector<16x512xf32>
    %5 = arith.addf %2, %4 : vector<16x512xf32>
    %cst_5 = arith.constant 0.000000e+00 : f32
    %6 = vector.broadcast %cst_5 : f32 to vector<16x512xf32>
    %7 = arith.maximumf %5, %6 : vector<16x512xf32>
    %8 = arith.truncf %7 : vector<16x512xf32> to vector<16x512xbf16>
    %c0_6 = arith.constant 0 : index
    %c0_7 = arith.constant 0 : index
    %9 = vector.load %arg4[%c0_6, %c0_7] : memref<512x512xbf16, #tpu.memory_space<vmem>>, vector<512x512xbf16>
    %cst_8 = arith.constant dense<0.000000e+00> : vector<16x512xf32>
    %10 = tpu.matmul %8, %9, %cst_8 {dimension_numbers = #tpu.dot_dimension_numbers<[1], [0], [0], [1], [0, 0, 1, 1], [], []>} : vector<16x512xbf16>, vector<512x512xbf16>, vector<16x512xf32> -> vector<16x512xf32>
    %c0_9 = arith.constant 0 : index
    %c0_10 = arith.constant 0 : index
    %11 = vector.load %arg5[%c0_9, %c0_10] : memref<1x512xf32, #tpu.memory_space<vmem>>, vector<1x512xf32>
    %12 = vector.broadcast %11 : vector<1x512xf32> to vector<16x512xf32>
    %13 = arith.addf %10, %12 : vector<16x512xf32>
    %cst_11 = arith.constant 0.000000e+00 : f32
    %14 = vector.broadcast %cst_11 : f32 to vector<16x512xf32>
    %15 = arith.maximumf %13, %14 : vector<16x512xf32>
    %16 = arith.truncf %15 : vector<16x512xf32> to vector<16x512xbf16>
    %c0_12 = arith.constant 0 : index
    %c0_13 = arith.constant 0 : index
    %17 = vector.load %arg6[%c0_12, %c0_13] : memref<512x256xbf16, #tpu.memory_space<vmem>>, vector<512x256xbf16>
    %cst_14 = arith.constant dense<0.000000e+00> : vector<16x256xf32>
    %18 = tpu.matmul %16, %17, %cst_14 {dimension_numbers = #tpu.dot_dimension_numbers<[1], [0], [0], [1], [0, 0, 1, 1], [], []>} : vector<16x512xbf16>, vector<512x256xbf16>, vector<16x256xf32> -> vector<16x256xf32>
    %c0_15 = arith.constant 0 : index
    %c0_16 = arith.constant 0 : index
    %19 = vector.load %arg7[%c0_15, %c0_16] : memref<1x256xf32, #tpu.memory_space<vmem>>, vector<1x256xf32>
    %20 = vector.broadcast %19 : vector<1x256xf32> to vector<16x256xf32>
    %21 = arith.addf %18, %20 : vector<16x256xf32>
    %cst_17 = arith.constant 0.000000e+00 : f32
    %22 = vector.broadcast %cst_17 : f32 to vector<16x256xf32>
    %23 = arith.maximumf %21, %22 : vector<16x256xf32>
    %24 = arith.truncf %23 : vector<16x256xf32> to vector<16x256xbf16>
    %c0_18 = arith.constant 0 : index
    %c0_19 = arith.constant 0 : index
    %25 = vector.load %arg8[%c0_18, %c0_19] : memref<256x128xbf16, #tpu.memory_space<vmem>>, vector<256x128xbf16>
    %cst_20 = arith.constant dense<0.000000e+00> : vector<16x128xf32>
    %26 = tpu.matmul %24, %25, %cst_20 {dimension_numbers = #tpu.dot_dimension_numbers<[1], [0], [0], [1], [0, 0, 1, 1], [], []>} : vector<16x256xbf16>, vector<256x128xbf16>, vector<16x128xf32> -> vector<16x128xf32>
    %c0_21 = arith.constant 0 : index
    %c0_22 = arith.constant 0 : index
    %27 = vector.load %arg9[%c0_21, %c0_22] : memref<1x128xf32, #tpu.memory_space<vmem>>, vector<1x128xf32>
    %28 = vector.broadcast %27 : vector<1x128xf32> to vector<16x128xf32>
    %29 = arith.addf %26, %28 : vector<16x128xf32>
    %cst_23 = arith.constant 0.000000e+00 : f32
    %30 = vector.broadcast %cst_23 : f32 to vector<16x128xf32>
    %31 = arith.maximumf %29, %30 : vector<16x128xf32>
    %32 = arith.truncf %31 : vector<16x128xf32> to vector<16x128xbf16>
    %c0_24 = arith.constant 0 : index
    %c0_25 = arith.constant 0 : index
    %33 = vector.load %arg10[%c0_24, %c0_25] : memref<1x128xbf16, #tpu.memory_space<vmem>>, vector<1x128xbf16>
    %34 = tpu.transpose %32, [1, 0] : vector<16x128xbf16> -> vector<128x16xbf16>
    %cst_26 = arith.constant dense<0.000000e+00> : vector<1x16xf32>
    %35 = tpu.matmul %33, %34, %cst_26 {dimension_numbers = #tpu.dot_dimension_numbers<[1], [0], [0], [1], [0, 0, 1, 1], [], []>} : vector<1x128xbf16>, vector<128x16xbf16>, vector<1x16xf32> -> vector<1x16xf32>
    %c0_27 = arith.constant 0 : index
    %c0_28 = arith.constant 0 : index
    %36 = vector.load %arg11[%c0_27, %c0_28] : memref<1x1xf32, #tpu.memory_space<vmem>>, vector<1x1xf32>
    %37 = vector.broadcast %36 : vector<1x1xf32> to vector<1x16xf32>
    %38 = arith.addf %35, %37 : vector<1x16xf32>
    %c0_29 = arith.constant 0 : index
    %c0_30 = arith.constant 0 : index
    %39 = vector.load %arg12[%c0_29, %c0_30] : memref<1x16xf32, #tpu.memory_space<vmem>>, vector<1x16xf32>
    tpu.vector_store %arg12[%c0_29, %c0_30], %38 {strides = array<i32>} : memref<1x16xf32, #tpu.memory_space<vmem>>, vector<1x16xf32>,
    return
  }
  func.func @transform_0(%arg0: i32) -> (i32, i32) {
    %c0_i32 = arith.constant 0 : i32
    %c0_i32_0 = arith.constant 0 : i32
    return %arg0, %c0_i32 : i32, i32
  }
  func.func @transform_1(%arg0: i32) -> (i32, i32) {
    %c0_i32 = arith.constant 0 : i32
    %c0_i32_0 = arith.constant 0 : i32
    %c0_i32_1 = arith.constant 0 : i32
    return %c0_i32, %c0_i32_0 : i32, i32
  }
  func.func @transform_2(%arg0: i32) -> (i32, i32) {
    %c0_i32 = arith.constant 0 : i32
    %c0_i32_0 = arith.constant 0 : i32
    %c0_i32_1 = arith.constant 0 : i32
    return %c0_i32, %c0_i32_0 : i32, i32
  }
  func.func @transform_3(%arg0: i32) -> (i32, i32) {
    %c0_i32 = arith.constant 0 : i32
    %c0_i32_0 = arith.constant 0 : i32
    %c0_i32_1 = arith.constant 0 : i32
    return %c0_i32, %c0_i32_0 : i32, i32
  }
  func.func @transform_4(%arg0: i32) -> (i32, i32) {
    %c0_i32 = arith.constant 0 : i32
    %c0_i32_0 = arith.constant 0 : i32
    %c0_i32_1 = arith.constant 0 : i32
    return %c0_i32, %c0_i32_0 : i32, i32
  }
  func.func @transform_5(%arg0: i32) -> (i32, i32) {
    %c0_i32 = arith.constant 0 : i32
    %c0_i32_0 = arith.constant 0 : i32
    %c0_i32_1 = arith.constant 0 : i32
    return %c0_i32, %c0_i32_0 : i32, i32
  }
  func.func @transform_6(%arg0: i32) -> (i32, i32) {
    %c0_i32 = arith.constant 0 : i32
    %c0_i32_0 = arith.constant 0 : i32
    %c0_i32_1 = arith.constant 0 : i32
    return %c0_i32, %c0_i32_0 : i32, i32
  }
  func.func @transform_7(%arg0: i32) -> (i32, i32) {
    %c0_i32 = arith.constant 0 : i32
    %c0_i32_0 = arith.constant 0 : i32
    %c0_i32_1 = arith.constant 0 : i32
    return %c0_i32, %c0_i32_0 : i32, i32
  }
  func.func @transform_8(%arg0: i32) -> (i32, i32) {
    %c0_i32 = arith.constant 0 : i32
    %c0_i32_0 = arith.constant 0 : i32
    %c0_i32_1 = arith.constant 0 : i32
    return %c0_i32, %c0_i32_0 : i32, i32
  }
  func.func @transform_9(%arg0: i32) -> (i32, i32) {
    %c0_i32 = arith.constant 0 : i32
    %c0_i32_0 = arith.constant 0 : i32
    %c0_i32_1 = arith.constant 0 : i32
    return %c0_i32, %c0_i32_0 : i32, i32
  }
  func.func @transform_10(%arg0: i32) -> (i32, i32) {
    %c0_i32 = arith.constant 0 : i32
    %c0_i32_0 = arith.constant 0 : i32
    %c0_i32_1 = arith.constant 0 : i32
    return %c0_i32, %c0_i32_0 : i32, i32
  }
  func.func @transform_11(%arg0: i32) -> (i32, i32) {
    %c0_i32 = arith.constant 0 : i32
    %c0_i32_0 = arith.constant 0 : i32
    return %c0_i32, %arg0 : i32, i32
  }
}

</mosaic_0001>

<llo_original>
// kernel: tpu_custom_call.1
$region0: #{tpu_custom_call.1}
  #allocation0 [shape = 'u32[]', space=smem, size = 0x4, offset = 0x4, fixed_abs, tag = 'smem constant byte address 0x4 - core index']
  #allocation1 [shape = 'u32[144,128]{1,0:T(1,128)}', space=vmem, size = 0x12000, scoped, tag = 'internal scratch']
  #allocation2 [shape = 'f32[1,1]{1,0:T(1,128)S(1)}', space=vmem, size = 0x200, scoped, tag = 'scoped memory for tpu_custom_call.1']
  %s0 = inlined_call_operand.hbm [shape: bf16[16,128], index: 0, kind: input, shape index: {}]
  %s1 = inlined_call_operand.hbm [shape: bf16[128,512], index: 1, kind: input, shape index: {}]
  %s2 = inlined_call_operand.vmem [shape: f32[1,512], index: 2, kind: input, shape index: {}]
  %s3 = inlined_call_operand.hbm [shape: bf16[512,512], index: 3, kind: input, shape index: {}]
  %s4 = inlined_call_operand.vmem [shape: f32[1,512], index: 4, kind: input, shape index: {}]
  %s5 = inlined_call_operand.hbm [shape: bf16[512,256], index: 5, kind: input, shape index: {}]
  %s6 = inlined_call_operand.vmem [shape: f32[1,256], index: 6, kind: input, shape index: {}]
  %s7 = inlined_call_operand.hbm [shape: bf16[256,128], index: 7, kind: input, shape index: {}]
  %s8 = inlined_call_operand.vmem [shape: f32[1,128], index: 8, kind: input, shape index: {}]
  %s9 = inlined_call_operand.vmem [shape: bf16[1,128], index: 9, kind: input, shape index: {}]
  %s10 = inlined_call_operand.<no memory space> [shape: f32[1,1], index: 10, kind: input, shape index: {}]
  %s11 = inlined_call_operand.hbm [shape: f32[1,16], index: 11, kind: output, shape index: {}]
  %s12 = sld [smem:[#allocation0]]
  $region74: #{tpu_custom_call.1} parent=0
    _
  %s14 = ssub.s32 1, %s12
  %s15 = scalar_select 0, %s14, %s12
  %v16 = vstv %s10
  %17 = vst [vmem:[#allocation2] sm:$0x1] %v16
  $region1: #{tpu_custom_call.1} parent=0
    #allocation3 [shape = 'u8[4096]{0}', space=vmem, size = 0x1000, scoped, tag = 'input window, operand 0, single buffered']
    #allocation4 [shape = 's32[1]{0}', space=sflag, size = 0x4, scoped, tag = 'scoped memory for tpu_custom_call.1']
    #allocation5 [shape = 's32[1]{0}', space=sflag, size = 0x4, scoped, tag = 'scoped memory for tpu_custom_call.1']
    #allocation6 [shape = 'u8[131072]{0}', space=vmem, size = 0x20000, scoped, tag = 'input window, operand 1, single buffered']
    #allocation7 [shape = 's32[1]{0}', space=sflag, size = 0x4, scoped, tag = 'scoped memory for tpu_custom_call.1']
    #allocation8 [shape = 'u8[524288]{0}', space=vmem, size = 0x80000, scoped, tag = 'input window, operand 3, single buffered']
    #allocation9 [shape = 'u8[262144]{0}', space=vmem, size = 0x40000, scoped, tag = 'input window, operand 5, single buffered']
    #allocation10 [shape = 's32[1]{0}', space=sflag, size = 0x4, scoped, tag = 'scoped memory for tpu_custom_call.1']
    #allocation11 [shape = 'u8[65536]{0}', space=vmem, size = 0x10000, scoped, tag = 'input window, operand 7, single buffered']
    #allocation12 [shape = 'u8[512]{0}', space=vmem, size = 0x400, scoped, tag = 'output window, operand 0, single buffered']
    %18 = vsyncpa [#allocation4], 0
    %19 = vsyncpa [#allocation7], 0
    %20 = vsyncpa [#allocation10], 0
    %21 = vsyncpa [#allocation5], 0
    // Predicated region
    $region2: #{tpu_custom_call.1} parent=1 // pred_check
      _
    $region3: #{tpu_custom_call.1} parent=1 // pred_check_branch
      %23 = sbr.rel (0) target = $region5
    $region4: #{tpu_custom_call.1} parent=1 // pred_region
      %s25 = ssub.s32 128, 128
      %26 = vsyncadd [#allocation4], %s25
      %s27 = sshll.u32 [#allocation3], 4
      %s28 = int_to_ptr.vmem [resolvable:$true] %s27
      %33 = dma.hbm_to_vmem [thread:$0]  %s0, 128, %s28, [#allocation4], 64, 64, 4
    $region5: #{tpu_custom_call.1} parent=1 // pred_fallthru
      _
    // Predicated region
    $region6: #{tpu_custom_call.1} parent=1 // pred_check
      _
    $region7: #{tpu_custom_call.1} parent=1 // pred_check_branch
      %35 = sbr.rel (0) target = $region9
    $region8: #{tpu_custom_call.1} parent=1 // pred_region
      %s37 = ssub.s32 4096, 4096
      %38 = vsyncadd [#allocation7], %s37
      %s39 = sshll.u32 [#allocation6], 4
      %s40 = int_to_ptr.vmem [resolvable:$true] %s39
      %45 = dma.hbm_to_vmem [thread:$0]  %s1, 4096, %s40, [#allocation7], 256, 256, 16
    $region9: #{tpu_custom_call.1} parent=1 // pred_fallthru
      _
    // Predicated region
    $region10: #{tpu_custom_call.1} parent=1 // pred_check
      _
    $region11: #{tpu_custom_call.1} parent=1 // pred_check_branch
      %47 = sbr.rel (0) target = $region13
    $region12: #{tpu_custom_call.1} parent=1 // pred_region
      _
    $region13: #{tpu_custom_call.1} parent=1 // pred_fallthru
      _
    // Predicated region
    $region14: #{tpu_custom_call.1} parent=1 // pred_check
      _
    $region15: #{tpu_custom_call.1} parent=1 // pred_check_branch
      %49 = sbr.rel (0) target = $region17
    $region16: #{tpu_custom_call.1} parent=1 // pred_region
      %s51 = ssub.s32 16384, 16384
      %52 = vsyncadd [#allocation7], %s51
      %s53 = sshll.u32 [#allocation8], 4
      %s54 = int_to_ptr.vmem [resolvable:$true] %s53
      %59 = dma.hbm_to_vmem [thread:$0]  %s3, 16384, %s54, [#allocation7], 256, 256, 16
    $region17: #{tpu_custom_call.1} parent=1 // pred_fallthru
      _
    // Predicated region
    $region18: #{tpu_custom_call.1} parent=1 // pred_check
      _
    $region19: #{tpu_custom_call.1} parent=1 // pred_check_branch
      %61 = sbr.rel (0) target = $region21
    $region20: #{tpu_custom_call.1} parent=1 // pred_region
      _
    $region21: #{tpu_custom_call.1} parent=1 // pred_fallthru
      _
    // Predicated region
    $region22: #{tpu_custom_call.1} parent=1 // pred_check
      _
    $region23: #{tpu_custom_call.1} parent=1 // pred_check_branch
      %63 = sbr.rel (0) target = $region25
    $region24: #{tpu_custom_call.1} parent=1 // pred_region
      %s65 = ssub.s32 8192, 8192
      %66 = vsyncadd [#allocation10], %s65
      %s67 = sshll.u32 [#allocation9], 4
      %s68 = int_to_ptr.vmem [resolvable:$true] %s67
      %73 = dma.hbm_to_vmem [thread:$0]  %s5, 8192, %s68, [#allocation10], 128, 128, 8
    $region25: #{tpu_custom_call.1} parent=1 // pred_fallthru
      _
    // Predicated region
    $region26: #{tpu_custom_call.1} parent=1 // pred_check
      _
    $region27: #{tpu_custom_call.1} parent=1 // pred_check_branch
      %75 = sbr.rel (0) target = $region29
    $region28: #{tpu_custom_call.1} parent=1 // pred_region
      _
    $region29: #{tpu_custom_call.1} parent=1 // pred_fallthru
      _
    // Predicated region
    $region30: #{tpu_custom_call.1} parent=1 // pred_check
      _
    $region31: #{tpu_custom_call.1} parent=1 // pred_check_branch
      %77 = sbr.rel (0) target = $region33
    $region32: #{tpu_custom_call.1} parent=1 // pred_region
      %s79 = ssub.s32 2048, 2048
      %80 = vsyncadd [#allocation10], %s79
      %s81 = sshll.u32 [#allocation11], 4
      %s82 = int_to_ptr.vmem [resolvable:$true] %s81
      %87 = dma.hbm_to_vmem [thread:$0]  %s7, 2048, %s82, [#allocation10], 64, 64, 4
    $region33: #{tpu_custom_call.1} parent=1 // pred_fallthru
      _
    // Predicated region
    $region34: #{tpu_custom_call.1} parent=1 // pred_check
      _
    $region35: #{tpu_custom_call.1} parent=1 // pred_check_branch
      %89 = sbr.rel (0) target = $region37
    $region36: #{tpu_custom_call.1} parent=1 // pred_region
      _
    $region37: #{tpu_custom_call.1} parent=1 // pred_fallthru
      _
    // Predicated region
    $region38: #{tpu_custom_call.1} parent=1 // pred_check
      _
    $region39: #{tpu_custom_call.1} parent=1 // pred_check_branch
      %91 = sbr.rel (0) target = $region41
    $region40: #{tpu_custom_call.1} parent=1 // pred_region
      _
    $region41: #{tpu_custom_call.1} parent=1 // pred_fallthru
      _
    // Predicated region
    $region42: #{tpu_custom_call.1} parent=1 // pred_check
      _
    $region43: #{tpu_custom_call.1} parent=1 // pred_check_branch
      %93 = sbr.rel (0) target = $region45
    $region44: #{tpu_custom_call.1} parent=1 // pred_region
      _
    $region45: #{tpu_custom_call.1} parent=1 // pred_fallthru
      _
    // Predicated region
    $region46: #{tpu_custom_call.1} parent=1 // pred_check
      _
    $region47: #{tpu_custom_call.1} parent=1 // pred_check_branch
      %95 = sbr.rel (0) target = $region49
    $region48: #{tpu_custom_call.1} parent=1 // pred_region
      %96 = dma.done [#allocation4], 128
    $region49: #{tpu_custom_call.1} parent=1 // pred_fallthru
      _
    // Predicated region
    $region50: #{tpu_custom_call.1} parent=1 // pred_check
      _
    $region51: #{tpu_custom_call.1} parent=1 // pred_check_branch
      %98 = sbr.rel (0) target = $region53
    $region52: #{tpu_custom_call.1} parent=1 // pred_region
      %99 = dma.done [#allocation7], 4096
    $region53: #{tpu_custom_call.1} parent=1 // pred_fallthru
      _
    // Predicated region
    $region54: #{tpu_custom_call.1} parent=1 // pred_check
      _
    $region55: #{tpu_custom_call.1} parent=1 // pred_check_branch
      %101 = sbr.rel (0) target = $region57
    $region56: #{tpu_custom_call.1} parent=1 // pred_region
      %102 = dma.done [#allocation7], 16384
    $region57: #{tpu_custom_call.1} parent=1 // pred_fallthru
      _
    // Predicated region
    $region58: #{tpu_custom_call.1} parent=1 // pred_check
      _
    $region59: #{tpu_custom_call.1} parent=1 // pred_check_branch
      %104 = sbr.rel (0) target = $region61
    $region60: #{tpu_custom_call.1} parent=1 // pred_region
      %105 = dma.done [#allocation10], 8192
    $region61: #{tpu_custom_call.1} parent=1 // pred_fallthru
      _
    // Predicated region
    $region62: #{tpu_custom_call.1} parent=1 // pred_check
      _
    $region63: #{tpu_custom_call.1} parent=1 // pred_check_branch
      %107 = sbr.rel (0) target = $region65
    $region64: #{tpu_custom_call.1} parent=1 // pred_region
      %108 = dma.done [#allocation10], 2048
    $region65: #{tpu_custom_call.1} parent=1 // pred_fallthru
      _
    %v110 = vld [vmem:[#allocation3] sm:$0xf]
    %v111 = vld [vmem:[#allocation3 + $0x4] sm:$0xf]
    %v112 = vld [vmem:[#allocation6] sm:$0xff]
    %v113 = vld [vmem:[#allocation6 + $0x8] sm:$0xff]
    %v114 = vld [vmem:[#allocation6 + $0x10] sm:$0xff]
    %v115 = vld [vmem:[#allocation6 + $0x18] sm:$0xff]
    %v116 = vld [vmem:[#allocation6 + $0x20] sm:$0xff]
    %v117 = vld [vmem:[#allocation6 + $0x28] sm:$0xff]
    %v118 = vld [vmem:[#allocation6 + $0x30] sm:$0xff]
    %v119 = vld [vmem:[#allocation6 + $0x38] sm:$0xff]
    %v120 = vld [vmem:[#allocation6 + $0x40] sm:$0xff]
    %v121 = vld [vmem:[#allocation6 + $0x48] sm:$0xff]
    %v122 = vld [vmem:[#allocation6 + $0x50] sm:$0xff]
    %v123 = vld [vmem:[#allocation6 + $0x58] sm:$0xff]
    %v124 = vld [vmem:[#allocation6 + $0x60] sm:$0xff]
    %v125 = vld [vmem:[#allocation6 + $0x68] sm:$0xff]
    %v126 = vld [vmem:[#allocation6 + $0x70] sm:$0xff]
    %v127 = vld [vmem:[#allocation6 + $0x78] sm:$0xff]
    %v128 = vld [vmem:[#allocation6 + $0x80] sm:$0xff]
    %v129 = vld [vmem:[#allocation6 + $0x88] sm:$0xff]
    %v130 = vld [vmem:[#allocation6 + $0x90] sm:$0xff]
    %v131 = vld [vmem:[#allocation6 + $0x98] sm:$0xff]
    %v132 = vld [vmem:[#allocation6 + $0xa0] sm:$0xff]
    %v133 = vld [vmem:[#allocation6 + $0xa8] sm:$0xff]
    %v134 = vld [vmem:[#allocation6 + $0xb0] sm:$0xff]
    %v135 = vld [vmem:[#allocation6 + $0xb8] sm:$0xff]
    %v136 = vld [vmem:[#allocation6 + $0xc0] sm:$0xff]
    %v137 = vld [vmem:[#allocation6 + $0xc8] sm:$0xff]
    %v138 = vld [vmem:[#allocation6 + $0xd0] sm:$0xff]
    %v139 = vld [vmem:[#allocation6 + $0xd8] sm:$0xff]
    %v140 = vld [vmem:[#allocation6 + $0xe0] sm:$0xff]
    %v141 = vld [vmem:[#allocation6 + $0xe8] sm:$0xff]
    %v142 = vld [vmem:[#allocation6 + $0xf0] sm:$0xff]
    %v143 = vld [vmem:[#allocation6 + $0xf8] sm:$0xff]
    %v144 = vld [vmem:[%s2] sm:$0xf]
    %v146 = vlaneseq
    %v147 = vshrl.u32 %v146, 7
    %v148 = vsub.s32 0, %v147
    %v149 = vrot.slane %v144, %v148
    %v150 = vlaneseq
    %v151 = vshrl.u32 %v150, 7
    %v152 = vsub.s32 1, %v151
    %v153 = vrot.slane %v144, %v152
    %v154 = vlaneseq
    %v155 = vshrl.u32 %v154, 7
    %v156 = vsub.s32 2, %v155
    %v157 = vrot.slane %v144, %v156
    %v158 = vlaneseq
    %v159 = vshrl.u32 %v158, 7
    %v160 = vsub.s32 3, %v159
    %v161 = vrot.slane %v144, %v160
    %v168 = vunpack.c.l.b16 %v110
    %v169 = vunpack.c.l.b16 %v111
    %v170 = vpack.c.b16 %v169, %v168
    %v204 = vunpack.c.l.b16 %v112
    %v205 = vunpack.c.h.b16 %v112
    %v206 = vunpack.c.l.b16 %v113
    %v207 = vunpack.c.h.b16 %v113
    %v208 = vunpack.c.l.b16 %v114
    %v209 = vunpack.c.h.b16 %v114
    %v210 = vunpack.c.l.b16 %v115
    %v211 = vunpack.c.h.b16 %v115
    %v212 = vunpack.c.l.b16 %v116
    %v213 = vunpack.c.h.b16 %v116
    %v214 = vunpack.c.l.b16 %v117
    %v215 = vunpack.c.h.b16 %v117
    %v216 = vunpack.c.l.b16 %v118
    %v217 = vunpack.c.h.b16 %v118
    %v218 = vunpack.c.l.b16 %v119
    %v219 = vunpack.c.h.b16 %v119
    %v220 = vunpack.c.l.b16 %v120
    %v221 = vunpack.c.h.b16 %v120
    %v222 = vunpack.c.l.b16 %v121
    %v223 = vunpack.c.h.b16 %v121
    %v224 = vunpack.c.l.b16 %v122
    %v225 = vunpack.c.h.b16 %v122
    %v226 = vunpack.c.l.b16 %v123
    %v227 = vunpack.c.h.b16 %v123
    %v228 = vunpack.c.l.b16 %v124
    %v229 = vunpack.c.h.b16 %v124
    %v230 = vunpack.c.l.b16 %v125
    %v231 = vunpack.c.h.b16 %v125
    %v232 = vunpack.c.l.b16 %v126
    %v233 = vunpack.c.h.b16 %v126
    %v234 = vunpack.c.l.b16 %v127
    %v235 = vunpack.c.h.b16 %v127
    %v236 = vunpack.c.l.b16 %v128
    %v237 = vunpack.c.h.b16 %v128
    %v238 = vunpack.c.l.b16 %v129
    %v239 = vunpack.c.h.b16 %v129
    %v240 = vunpack.c.l.b16 %v130
    %v241 = vunpack.c.h.b16 %v130
    %v242 = vunpack.c.l.b16 %v131
    %v243 = vunpack.c.h.b16 %v131
    %v244 = vunpack.c.l.b16 %v132
    %v245 = vunpack.c.h.b16 %v132
    %v246 = vunpack.c.l.b16 %v133
    %v247 = vunpack.c.h.b16 %v133
    %v248 = vunpack.c.l.b16 %v134
    %v249 = vunpack.c.h.b16 %v134
    %v250 = vunpack.c.l.b16 %v135
    %v251 = vunpack.c.h.b16 %v135
    %v252 = vunpack.c.l.b16 %v136
    %v253 = vunpack.c.h.b16 %v136
    %v254 = vunpack.c.l.b16 %v137
    %v255 = vunpack.c.h.b16 %v137
    %v256 = vunpack.c.l.b16 %v138
    %v257 = vunpack.c.h.b16 %v138
    %v258 = vunpack.c.l.b16 %v139
    %v259 = vunpack.c.h.b16 %v139
    %v260 = vunpack.c.l.b16 %v140
    %v261 = vunpack.c.h.b16 %v140
    %v262 = vunpack.c.l.b16 %v141
    %v263 = vunpack.c.h.b16 %v141
    %v264 = vunpack.c.l.b16 %v142
    %v265 = vunpack.c.h.b16 %v142
    %v266 = vunpack.c.l.b16 %v143
    %v267 = vunpack.c.h.b16 %v143
    %v268 = vpack.c.b16 %v208, %v204
    %v269 = vpack.c.b16 %v209, %v205
    %v270 = vpack.c.b16 %v210, %v206
    %v271 = vpack.c.b16 %v211, %v207
    %v272 = vpack.c.b16 %v216, %v212
    %v273 = vpack.c.b16 %v217, %v213
    %v274 = vpack.c.b16 %v218, %v214
    %v275 = vpack.c.b16 %v219, %v215
    %v276 = vpack.c.b16 %v224, %v220
    %v277 = vpack.c.b16 %v225, %v221
    %v278 = vpack.c.b16 %v226, %v222
    %v279 = vpack.c.b16 %v227, %v223
    %v280 = vpack.c.b16 %v232, %v228
    %v281 = vpack.c.b16 %v233, %v229
    %v282 = vpack.c.b16 %v234, %v230
    %v283 = vpack.c.b16 %v235, %v231
    %v284 = vpack.c.b16 %v240, %v236
    %v285 = vpack.c.b16 %v241, %v237
    %v286 = vpack.c.b16 %v242, %v238
    %v287 = vpack.c.b16 %v243, %v239
    %v288 = vpack.c.b16 %v248, %v244
    %v289 = vpack.c.b16 %v249, %v245
    %v290 = vpack.c.b16 %v250, %v246
    %v291 = vpack.c.b16 %v251, %v247
    %v292 = vpack.c.b16 %v256, %v252
    %v293 = vpack.c.b16 %v257, %v253
    %v294 = vpack.c.b16 %v258, %v254
    %v295 = vpack.c.b16 %v259, %v255
    %v296 = vpack.c.b16 %v264, %v260
    %v297 = vpack.c.b16 %v265, %v261
    %v298 = vpack.c.b16 %v266, %v262
    %v299 = vpack.c.b16 %v267, %v263
    %332 = vmatprep.subr.bf16.mxu0 %v269
    %333 = vmatpush1.bf16.msra.mxu0 %v268
    %334 = vmatprep.subr.bf16.mxu0 %v273
    %335 = vmatpush1.bf16.msra.mxu0 %v272
    %336 = vmatprep.subr.bf16.mxu0 %v277
    %337 = vmatpush1.bf16.msra.mxu0 %v276
    %338 = vmatprep.subr.bf16.mxu0 %v281
    %339 = vmatpush1.bf16.msra.mxu0 %v280
    %340 = vmatprep.subr.bf16.mxu0 %v285
    %341 = vmatpush1.bf16.msra.mxu0 %v284
    %342 = vmatprep.subr.bf16.mxu0 %v289
    %343 = vmatpush1.bf16.msra.mxu0 %v288
    %344 = vmatprep.subr.bf16.mxu0 %v293
    %345 = vmatpush1.bf16.msra.mxu0 %v292
    %346 = vmatprep.subr.bf16.mxu0 %v297
    %347 = vmatpush1.bf16.msra.mxu0 %v296
    %348 = vmatprep.subr.bf16.mxu0 0
    %349 = vmatpush1.bf16.msra.mxu0 0
    %350 = vmatprep.subr.bf16.mxu0 0
    %351 = vmatpush1.bf16.msra.mxu0 0
    %352 = vmatprep.subr.bf16.mxu0 0
    %353 = vmatpush1.bf16.msra.mxu0 0
    %354 = vmatprep.subr.bf16.mxu0 0
    %355 = vmatpush1.bf16.msra.mxu0 0
    %356 = vmatprep.subr.bf16.mxu0 0
    %357 = vmatpush1.bf16.msra.mxu0 0
    %358 = vmatprep.subr.bf16.mxu0 0
    %359 = vmatpush1.bf16.msra.mxu0 0
    %360 = vmatprep.subr.bf16.mxu0 0
    %361 = vmatpush1.bf16.msra.mxu0 0
    %362 = vmatprep.subr.bf16.mxu0 0
    %363 = vmatpush1.bf16.msra.mxu0 0
    %364 = vmatprep.mubr.bf16.mxu0 0
    %365 = vmatmul.mubr.bf16.gmra.mrb[0].mxu0 %v170
    %v366 = vpop.f32.mrb[0].mxu0
    %v367 = vadd.f32 %v149, %v366
    %v368 = vpop.f32.mrb[0].mxu0
    %v369 = vadd.f32 %v153, %v368
    %v370 = vpop.f32.mrb[0].mxu0
    %v371 = vadd.f32 %v149, %v370
    %v372 = vpop.f32.mrb[0].mxu0
    %v373 = vadd.f32 %v153, %v372
    %374 = vdwg.mxu0
    %375 = vmatprep.subr.bf16.mxu0 %v271
    %376 = vmatpush1.bf16.msra.mxu0 %v270
    %377 = vmatprep.subr.bf16.mxu0 %v275
    %378 = vmatpush1.bf16.msra.mxu0 %v274
    %379 = vmatprep.subr.bf16.mxu0 %v279
    %380 = vmatpush1.bf16.msra.mxu0 %v278
    %381 = vmatprep.subr.bf16.mxu0 %v283
    %382 = vmatpush1.bf16.msra.mxu0 %v282
    %383 = vmatprep.subr.bf16.mxu0 %v287
    %384 = vmatpush1.bf16.msra.mxu0 %v286
    %385 = vmatprep.subr.bf16.mxu0 %v291
    %386 = vmatpush1.bf16.msra.mxu0 %v290
    %387 = vmatprep.subr.bf16.mxu0 %v295
    %388 = vmatpush1.bf16.msra.mxu0 %v294
    %389 = vmatprep.subr.bf16.mxu0 %v299
    %390 = vmatpush1.bf16.msra.mxu0 %v298
    %391 = vmatprep.subr.bf16.mxu0 0
    %392 = vmatpush1.bf16.msra.mxu0 0
    %393 = vmatprep.subr.bf16.mxu0 0
    %394 = vmatpush1.bf16.msra.mxu0 0
    %395 = vmatprep.subr.bf16.mxu0 0
    %396 = vmatpush1.bf16.msra.mxu0 0
    %397 = vmatprep.subr.bf16.mxu0 0
    %398 = vmatpush1.bf16.msra.mxu0 0
    %399 = vmatprep.subr.bf16.mxu0 0
    %400 = vmatpush1.bf16.msra.mxu0 0
    %401 = vmatprep.subr.bf16.mxu0 0
    %402 = vmatpush1.bf16.msra.mxu0 0
    %403 = vmatprep.subr.bf16.mxu0 0
    %404 = vmatpush1.bf16.msra.mxu0 0
    %405 = vmatprep.subr.bf16.mxu0 0
    %406 = vmatpush1.bf16.msra.mxu0 0
    %407 = vmatprep.mubr.bf16.mxu0 0
    %408 = vmatmul.mubr.bf16.gmra.mrb[0].mxu0 %v170
    %v409 = vpop.f32.mrb[0].mxu0
    %v410 = vadd.f32 %v157, %v409
    %v411 = vpop.f32.mrb[0].mxu0
    %v412 = vadd.f32 %v161, %v411
    %v413 = vpop.f32.mrb[0].mxu0
    %v414 = vadd.f32 %v157, %v413
    %v415 = vpop.f32.mrb[0].mxu0
    %v416 = vadd.f32 %v161, %v415
    %417 = vdwg.mxu0
    %v418 = vmax.f32 %v367, 0.0
    %v419 = vmax.f32 %v369, 0.0
    %v420 = vmax.f32 %v410, 0.0
    %v421 = vmax.f32 %v412, 0.0
    %v422 = vmax.f32 %v371, 0.0
    %v423 = vmax.f32 %v373, 0.0
    %v424 = vmax.f32 %v414, 0.0
    %v425 = vmax.f32 %v416, 0.0
    %v426 = vpack.c.bf16 %v422, %v418
    %v427 = vpack.c.bf16 %v423, %v419
    %v428 = vpack.c.bf16 %v424, %v420
    %v429 = vpack.c.bf16 %v425, %v421
    %v430 = vld [vmem:[#allocation8] sm:$0xff]
    %v431 = vld [vmem:[#allocation8 + $0x8] sm:$0xff]
    %v432 = vld [vmem:[#allocation8 + $0x10] sm:$0xff]
    %v433 = vld [vmem:[#allocation8 + $0x18] sm:$0xff]
    %v434 = vld [vmem:[#allocation8 + $0x20] sm:$0xff]
    %v435 = vld [vmem:[#allocation8 + $0x28] sm:$0xff]
    %v436 = vld [vmem:[#allocation8 + $0x30] sm:$0xff]
    %v437 = vld [vmem:[#allocation8 + $0x38] sm:$0xff]
    %v438 = vld [vmem:[#allocation8 + $0x40] sm:$0xff]
    %v439 = vld [vmem:[#allocation8 + $0x48] sm:$0xff]
    %v440 = vld [vmem:[#allocation8 + $0x50] sm:$0xff]
    %v441 = vld [vmem:[#allocation8 + $0x58] sm:$0xff]
    %v442 = vld [vmem:[#allocation8 + $0x60] sm:$0xff]
    %v443 = vld [vmem:[#allocation8 + $0x68] sm:$0xff]
    %v444 = vld [vmem:[#allocation8 + $0x70] sm:$0xff]
    %v445 = vld [vmem:[#allocation8 + $0x78] sm:$0xff]
    %v446 = vld [vmem:[#allocation8 + $0x80] sm:$0xff]
    %v447 = vld [vmem:[#allocation8 + $0x88] sm:$0xff]
    %v448 = vld [vmem:[#allocation8 + $0x90] sm:$0xff]
    %v449 = vld [vmem:[#allocation8 + $0x98] sm:$0xff]
    %v450 = vld [vmem:[#allocation8 + $0xa0] sm:$0xff]
    %v451 = vld [vmem:[#allocation8 + $0xa8] sm:$0xff]
    %v452 = vld [vmem:[#allocation8 + $0xb0] sm:$0xff]
    %v453 = vld [vmem:[#allocation8 + $0xb8] sm:$0xff]
    %v454 = vld [vmem:[#allocation8 + $0xc0] sm:$0xff]
    %v455 = vld [vmem:[#allocation8 + $0xc8] sm:$0xff]
    %v456 = vld [vmem:[#allocation8 + $0xd0] sm:$0xff]
    %v457 = vld [vmem:[#allocation8 + $0xd8] sm:$0xff]
    %v458 = vld [vmem:[#allocation8 + $0xe0] sm:$0xff]
    %v459 = vld [vmem:[#allocation8 + $0xe8] sm:$0xff]
    %v460 = vld [vmem:[#allocation8 + $0xf0] sm:$0xff]
    %v461 = vld [vmem:[#allocation8 + $0xf8] sm:$0xff]
    %v462 = vld [vmem:[#allocation8 + $0x100] sm:$0xff]
    %v463 = vld [vmem:[#allocation8 + $0x108] sm:$0xff]
    %v464 = vld [vmem:[#allocation8 + $0x110] sm:$0xff]
    %v465 = vld [vmem:[#allocation8 + $0x118] sm:$0xff]
    %v466 = vld [vmem:[#allocation8 + $0x120] sm:$0xff]
    %v467 = vld [vmem:[#allocation8 + $0x128] sm:$0xff]
    %v468 = vld [vmem:[#allocation8 + $0x130] sm:$0xff]
    %v469 = vld [vmem:[#allocation8 + $0x138] sm:$0xff]
    %v470 = vld [vmem:[#allocation8 + $0x140] sm:$0xff]
    %v471 = vld [vmem:[#allocation8 + $0x148] sm:$0xff]
    %v472 = vld [vmem:[#allocation8 + $0x150] sm:$0xff]
    %v473 = vld [vmem:[#allocation8 + $0x158] sm:$0xff]
    %v474 = vld [vmem:[#allocation8 + $0x160] sm:$0xff]
    %v475 = vld [vmem:[#allocation8 + $0x168] sm:$0xff]
    %v476 = vld [vmem:[#allocation8 + $0x170] sm:$0xff]
    %v477 = vld [vmem:[#allocation8 + $0x178] sm:$0xff]
    %v478 = vld [vmem:[#allocation8 + $0x180] sm:$0xff]
    %v479 = vld [vmem:[#allocation8 + $0x188] sm:$0xff]
    %v480 = vld [vmem:[#allocation8 + $0x190] sm:$0xff]
    %v481 = vld [vmem:[#allocation8 + $0x198] sm:$0xff]
    %v482 = vld [vmem:[#allocation8 + $0x1a0] sm:$0xff]
    %v483 = vld [vmem:[#allocation8 + $0x1a8] sm:$0xff]
    %v484 = vld [vmem:[#allocation8 + $0x1b0] sm:$0xff]
    %v485 = vld [vmem:[#allocation8 + $0x1b8] sm:$0xff]
    %v486 = vld [vmem:[#allocation8 + $0x1c0] sm:$0xff]
    %v487 = vld [vmem:[#allocation8 + $0x1c8] sm:$0xff]
    %v488 = vld [vmem:[#allocation8 + $0x1d0] sm:$0xff]
    %v489 = vld [vmem:[#allocation8 + $0x1d8] sm:$0xff]
    %v490 = vld [vmem:[#allocation8 + $0x1e0] sm:$0xff]
    %v491 = vld [vmem:[#allocation8 + $0x1e8] sm:$0xff]
    %v492 = vld [vmem:[#allocation8 + $0x1f0] sm:$0xff]
    %v493 = vld [vmem:[#allocation8 + $0x1f8] sm:$0xff]
    %v494 = vld [vmem:[#allocation8 + $0x200] sm:$0xff]
    %v495 = vld [vmem:[#allocation8 + $0x208] sm:$0xff]
    %v496 = vld [vmem:[#allocation8 + $0x210] sm:$0xff]
    %v497 = vld [vmem:[#allocation8 + $0x218] sm:$0xff]
    %v498 = vld [vmem:[#allocation8 + $0x220] sm:$0xff]
    %v499 = vld [vmem:[#allocation8 + $0x228] sm:$0xff]
    %v500 = vld [vmem:[#allocation8 + $0x230] sm:$0xff]
    %v501 = vld [vmem:[#allocation8 + $0x238] sm:$0xff]
    %v502 = vld [vmem:[#allocation8 + $0x240] sm:$0xff]
    %v503 = vld [vmem:[#allocation8 + $0x248] sm:$0xff]
    %v504 = vld [vmem:[#allocation8 + $0x250] sm:$0xff]
    %v505 = vld [vmem:[#allocation8 + $0x258] sm:$0xff]
    %v506 = vld [vmem:[#allocation8 + $0x260] sm:$0xff]
    %v507 = vld [vmem:[#allocation8 + $0x268] sm:$0xff]
    %v508 = vld [vmem:[#allocation8 + $0x270] sm:$0xff]
    %v509 = vld [vmem:[#allocation8 + $0x278] sm:$0xff]
    %v510 = vld [vmem:[#allocation8 + $0x280] sm:$0xff]
    %v511 = vld [vmem:[#allocation8 + $0x288] sm:$0xff]
    %v512 = vld [vmem:[#allocation8 + $0x290] sm:$0xff]
    %v513 = vld [vmem:[#allocation8 + $0x298] sm:$0xff]
    %v514 = vld [vmem:[#allocation8 + $0x2a0] sm:$0xff]
    %v515 = vld [vmem:[#allocation8 + $0x2a8] sm:$0xff]
    %v516 = vld [vmem:[#allocation8 + $0x2b0] sm:$0xff]
    %v517 = vld [vmem:[#allocation8 + $0x2b8] sm:$0xff]
    %v518 = vld [vmem:[#allocation8 + $0x2c0] sm:$0xff]
    %v519 = vld [vmem:[#allocation8 + $0x2c8] sm:$0xff]
    %v520 = vld [vmem:[#allocation8 + $0x2d0] sm:$0xff]
    %v521 = vld [vmem:[#allocation8 + $0x2d8] sm:$0xff]
    %v522 = vld [vmem:[#allocation8 + $0x2e0] sm:$0xff]
    %v523 = vld [vmem:[#allocation8 + $0x2e8] sm:$0xff]
    %v524 = vld [vmem:[#allocation8 + $0x2f0] sm:$0xff]
    %v525 = vld [vmem:[#allocation8 + $0x2f8] sm:$0xff]
    %v526 = vld [vmem:[#allocation8 + $0x300] sm:$0xff]
    %v527 = vld [vmem:[#allocation8 + $0x308] sm:$0xff]
    %v528 = vld [vmem:[#allocation8 + $0x310] sm:$0xff]
    %v529 = vld [vmem:[#allocation8 + $0x318] sm:$0xff]
    %v530 = vld [vmem:[#allocation8 + $0x320] sm:$0xff]
    %v531 = vld [vmem:[#allocation8 + $0x328] sm:$0xff]
    %v532 = vld [vmem:[#allocation8 + $0x330] sm:$0xff]
    %v533 = vld [vmem:[#allocation8 + $0x338] sm:$0xff]
    %v534 = vld [vmem:[#allocation8 + $0x340] sm:$0xff]
    %v535 = vld [vmem:[#allocation8 + $0x348] sm:$0xff]
    %v536 = vld [vmem:[#allocation8 + $0x350] sm:$0xff]
    %v537 = vld [vmem:[#allocation8 + $0x358] sm:$0xff]
    %v538 = vld [vmem:[#allocation8 + $0x360] sm:$0xff]
    %v539 = vld [vmem:[#allocation8 + $0x368] sm:$0xff]
    %v540 = vld [vmem:[#allocation8 + $0x370] sm:$0xff]
    %v541 = vld [vmem:[#allocation8 + $0x378] sm:$0xff]
    %v542 = vld [vmem:[#allocation8 + $0x380] sm:$0xff]
    %v543 = vld [vmem:[#allocation8 + $0x388] sm:$0xff]
    %v544 = vld [vmem:[#allocation8 + $0x390] sm:$0xff]
    %v545 = vld [vmem:[#allocation8 + $0x398] sm:$0xff]
    %v546 = vld [vmem:[#allocation8 + $0x3a0] sm:$0xff]
    %v547 = vld [vmem:[#allocation8 + $0x3a8] sm:$0xff]
    %v548 = vld [vmem:[#allocation8 + $0x3b0] sm:$0xff]
    %v549 = vld [vmem:[#allocation8 + $0x3b8] sm:$0xff]
    %v550 = vld [vmem:[#allocation8 + $0x3c0] sm:$0xff]
    %v551 = vld [vmem:[#allocation8 + $0x3c8] sm:$0xff]
    %v552 = vld [vmem:[#allocation8 + $0x3d0] sm:$0xff]
    %v553 = vld [vmem:[#allocation8 + $0x3d8] sm:$0xff]
    %v554 = vld [vmem:[#allocation8 + $0x3e0] sm:$0xff]
    %v555 = vld [vmem:[#allocation8 + $0x3e8] sm:$0xff]
    %v556 = vld [vmem:[#allocation8 + $0x3f0] sm:$0xff]
    %v557 = vld [vmem:[#allocation8 + $0x3f8] sm:$0xff]
    %v558 = vld [vmem:[%s4] sm:$0xf]
    %v560 = vlaneseq
    %v561 = vshrl.u32 %v560, 7
    %v562 = vsub.s32 0, %v561
    %v563 = vrot.slane %v558, %v562
    %v564 = vlaneseq
    %v565 = vshrl.u32 %v564, 7
    %v566 = vsub.s32 1, %v565
    %v567 = vrot.slane %v558, %v566
    %v568 = vlaneseq
    %v569 = vshrl.u32 %v568, 7
    %v570 = vsub.s32 2, %v569
    %v571 = vrot.slane %v558, %v570
    %v572 = vlaneseq
    %v573 = vshrl.u32 %v572, 7
    %v574 = vsub.s32 3, %v573
    %v575 = vrot.slane %v558, %v574
    %v708 = vunpack.c.l.b16 %v430
    %v709 = vunpack.c.h.b16 %v430
    %v710 = vunpack.c.l.b16 %v431
    %v711 = vunpack.c.h.b16 %v431
    %v712 = vunpack.c.l.b16 %v432
    %v713 = vunpack.c.h.b16 %v432
    %v714 = vunpack.c.l.b16 %v433
    %v715 = vunpack.c.h.b16 %v433
    %v716 = vunpack.c.l.b16 %v434
    %v717 = vunpack.c.h.b16 %v434
    %v718 = vunpack.c.l.b16 %v435
    %v719 = vunpack.c.h.b16 %v435
    %v720 = vunpack.c.l.b16 %v436
    %v721 = vunpack.c.h.b16 %v436
    %v722 = vunpack.c.l.b16 %v437
    %v723 = vunpack.c.h.b16 %v437
    %v724 = vunpack.c.l.b16 %v438
    %v725 = vunpack.c.h.b16 %v438
    %v726 = vunpack.c.l.b16 %v439
    %v727 = vunpack.c.h.b16 %v439
    %v728 = vunpack.c.l.b16 %v440
    %v729 = vunpack.c.h.b16 %v440
    %v730 = vunpack.c.l.b16 %v441
    %v731 = vunpack.c.h.b16 %v441
    %v732 = vunpack.c.l.b16 %v442
    %v733 = vunpack.c.h.b16 %v442
    %v734 = vunpack.c.l.b16 %v443
    %v735 = vunpack.c.h.b16 %v443
    %v736 = vunpack.c.l.b16 %v444
    %v737 = vunpack.c.h.b16 %v444
    %v738 = vunpack.c.l.b16 %v445
    %v739 = vunpack.c.h.b16 %v445
    %v740 = vunpack.c.l.b16 %v446
    %v741 = vunpack.c.h.b16 %v446
    %v742 = vunpack.c.l.b16 %v447
    %v743 = vunpack.c.h.b16 %v447
    %v744 = vunpack.c.l.b16 %v448
    %v745 = vunpack.c.h.b16 %v448
    %v746 = vunpack.c.l.b16 %v449
    %v747 = vunpack.c.h.b16 %v449
    %v748 = vunpack.c.l.b16 %v450
    %v749 = vunpack.c.h.b16 %v450
    %v750 = vunpack.c.l.b16 %v451
    %v751 = vunpack.c.h.b16 %v451
    %v752 = vunpack.c.l.b16 %v452
    %v753 = vunpack.c.h.b16 %v452
    %v754 = vunpack.c.l.b16 %v453
    %v755 = vunpack.c.h.b16 %v453
    %v756 = vunpack.c.l.b16 %v454
    %v757 = vunpack.c.h.b16 %v454
    %v758 = vunpack.c.l.b16 %v455
    %v759 = vunpack.c.h.b16 %v455
    %v760 = vunpack.c.l.b16 %v456
    %v761 = vunpack.c.h.b16 %v456
    %v762 = vunpack.c.l.b16 %v457
    %v763 = vunpack.c.h.b16 %v457
    %v764 = vunpack.c.l.b16 %v458
    %v765 = vunpack.c.h.b16 %v458
    %v766 = vunpack.c.l.b16 %v459
    %v767 = vunpack.c.h.b16 %v459
    %v768 = vunpack.c.l.b16 %v460
    %v769 = vunpack.c.h.b16 %v460
    %v770 = vunpack.c.l.b16 %v461
    %v771 = vunpack.c.h.b16 %v461
    %v772 = vunpack.c.l.b16 %v462
    %v773 = vunpack.c.h.b16 %v462
    %v774 = vunpack.c.l.b16 %v463
    %v775 = vunpack.c.h.b16 %v463
    %v776 = vunpack.c.l.b16 %v464
    %v777 = vunpack.c.h.b16 %v464
    %v778 = vunpack.c.l.b16 %v465
    %v779 = vunpack.c.h.b16 %v465
    %v780 = vunpack.c.l.b16 %v466
    %v781 = vunpack.c.h.b16 %v466
    %v782 = vunpack.c.l.b16 %v467
    %v783 = vunpack.c.h.b16 %v467
    %v784 = vunpack.c.l.b16 %v468
    %v785 = vunpack.c.h.b16 %v468
    %v786 = vunpack.c.l.b16 %v469
    %v787 = vunpack.c.h.b16 %v469
    %v788 = vunpack.c.l.b16 %v470
    %v789 = vunpack.c.h.b16 %v470
    %v790 = vunpack.c.l.b16 %v471
    %v791 = vunpack.c.h.b16 %v471
    %v792 = vunpack.c.l.b16 %v472
    %v793 = vunpack.c.h.b16 %v472
    %v794 = vunpack.c.l.b16 %v473
    %v795 = vunpack.c.h.b16 %v473
    %v796 = vunpack.c.l.b16 %v474
    %v797 = vunpack.c.h.b16 %v474
    %v798 = vunpack.c.l.b16 %v475
    %v799 = vunpack.c.h.b16 %v475
    %v800 = vunpack.c.l.b16 %v476
    %v801 = vunpack.c.h.b16 %v476
    %v802 = vunpack.c.l.b16 %v477
    %v803 = vunpack.c.h.b16 %v477
    %v804 = vunpack.c.l.b16 %v478
    %v805 = vunpack.c.h.b16 %v478
    %v806 = vunpack.c.l.b16 %v479
    %v807 = vunpack.c.h.b16 %v479
    %v808 = vunpack.c.l.b16 %v480
    %v809 = vunpack.c.h.b16 %v480
    %v810 = vunpack.c.l.b16 %v481
    %v811 = vunpack.c.h.b16 %v481
    %v812 = vunpack.c.l.b16 %v482
    %v813 = vunpack.c.h.b16 %v482
    %v814 = vunpack.c.l.b16 %v483
    %v815 = vunpack.c.h.b16 %v483
    %v816 = vunpack.c.l.b16 %v484
    %v817 = vunpack.c.h.b16 %v484
    %v818 = vunpack.c.l.b16 %v485
    %v819 = vunpack.c.h.b16 %v485
    %v820 = vunpack.c.l.b16 %v486
    %v821 = vunpack.c.h.b16 %v486
    %v822 = vunpack.c.l.b16 %v487
    %v823 = vunpack.c.h.b16 %v487
    %v824 = vunpack.c.l.b16 %v488
    %v825 = vunpack.c.h.b16 %v488
    %v826 = vunpack.c.l.b16 %v489
    %v827 = vunpack.c.h.b16 %v489
    %v828 = vunpack.c.l.b16 %v490
    %v829 = vunpack.c.h.b16 %v490
    %v830 = vunpack.c.l.b16 %v491
    %v831 = vunpack.c.h.b16 %v491
    %v832 = vunpack.c.l.b16 %v492
    %v833 = vunpack.c.h.b16 %v492
    %v834 = vunpack.c.l.b16 %v493
    %v835 = vunpack.c.h.b16 %v493
    %v836 = vunpack.c.l.b16 %v494
    %v837 = vunpack.c.h.b16 %v494
    %v838 = vunpack.c.l.b16 %v495
    %v839 = vunpack.c.h.b16 %v495
    %v840 = vunpack.c.l.b16 %v496
    %v841 = vunpack.c.h.b16 %v496
    %v842 = vunpack.c.l.b16 %v497
    %v843 = vunpack.c.h.b16 %v497
    %v844 = vunpack.c.l.b16 %v498
    %v845 = vunpack.c.h.b16 %v498
    %v846 = vunpack.c.l.b16 %v499
    %v847 = vunpack.c.h.b16 %v499
    %v848 = vunpack.c.l.b16 %v500
    %v849 = vunpack.c.h.b16 %v500
    %v850 = vunpack.c.l.b16 %v501
    %v851 = vunpack.c.h.b16 %v501
    %v852 = vunpack.c.l.b16 %v502
    %v853 = vunpack.c.h.b16 %v502
    %v854 = vunpack.c.l.b16 %v503
    %v855 = vunpack.c.h.b16 %v503
    %v856 = vunpack.c.l.b16 %v504
    %v857 = vunpack.c.h.b16 %v504
    %v858 = vunpack.c.l.b16 %v505
    %v859 = vunpack.c.h.b16 %v505
    %v860 = vunpack.c.l.b16 %v506
    %v861 = vunpack.c.h.b16 %v506
    %v862 = vunpack.c.l.b16 %v507
    %v863 = vunpack.c.h.b16 %v507
    %v864 = vunpack.c.l.b16 %v508
    %v865 = vunpack.c.h.b16 %v508
    %v866 = vunpack.c.l.b16 %v509
    %v867 = vunpack.c.h.b16 %v509
    %v868 = vunpack.c.l.b16 %v510
    %v869 = vunpack.c.h.b16 %v510
    %v870 = vunpack.c.l.b16 %v511
    %v871 = vunpack.c.h.b16 %v511
    %v872 = vunpack.c.l.b16 %v512
    %v873 = vunpack.c.h.b16 %v512
    %v874 = vunpack.c.l.b16 %v513
    %v875 = vunpack.c.h.b16 %v513
    %v876 = vunpack.c.l.b16 %v514
    %v877 = vunpack.c.h.b16 %v514
    %v878 = vunpack.c.l.b16 %v515
    %v879 = vunpack.c.h.b16 %v515
    %v880 = vunpack.c.l.b16 %v516
    %v881 = vunpack.c.h.b16 %v516
    %v882 = vunpack.c.l.b16 %v517
    %v883 = vunpack.c.h.b16 %v517
    %v884 = vunpack.c.l.b16 %v518
    %v885 = vunpack.c.h.b16 %v518
    %v886 = vunpack.c.l.b16 %v519
    %v887 = vunpack.c.h.b16 %v519
    %v888 = vunpack.c.l.b16 %v520
    %v889 = vunpack.c.h.b16 %v520
    %v890 = vunpack.c.l.b16 %v521
    %v891 = vunpack.c.h.b16 %v521
    %v892 = vunpack.c.l.b16 %v522
    %v893 = vunpack.c.h.b16 %v522
    %v894 = vunpack.c.l.b16 %v523
    %v895 = vunpack.c.h.b16 %v523
    %v896 = vunpack.c.l.b16 %v524
    %v897 = vunpack.c.h.b16 %v524
    %v898 = vunpack.c.l.b16 %v525
    %v899 = vunpack.c.h.b16 %v525
    %v900 = vunpack.c.l.b16 %v526
    %v901 = vunpack.c.h.b16 %v526
    %v902 = vunpack.c.l.b16 %v527
    %v903 = vunpack.c.h.b16 %v527
    %v904 = vunpack.c.l.b16 %v528
    %v905 = vunpack.c.h.b16 %v528
    %v906 = vunpack.c.l.b16 %v529
    %v907 = vunpack.c.h.b16 %v529
    %v908 = vunpack.c.l.b16 %v530
    %v909 = vunpack.c.h.b16 %v530
    %v910 = vunpack.c.l.b16 %v531
    %v911 = vunpack.c.h.b16 %v531
    %v912 = vunpack.c.l.b16 %v532
    %v913 = vunpack.c.h.b16 %v532
    %v914 = vunpack.c.l.b16 %v533
    %v915 = vunpack.c.h.b16 %v533
    %v916 = vunpack.c.l.b16 %v534
    %v917 = vunpack.c.h.b16 %v534
    %v918 = vunpack.c.l.b16 %v535
    %v919 = vunpack.c.h.b16 %v535
    %v920 = vunpack.c.l.b16 %v536
    %v921 = vunpack.c.h.b16 %v536
    %v922 = vunpack.c.l.b16 %v537
    %v923 = vunpack.c.h.b16 %v537
    %v924 = vunpack.c.l.b16 %v538
    %v925 = vunpack.c.h.b16 %v538
    %v926 = vunpack.c.l.b16 %v539
    %v927 = vunpack.c.h.b16 %v539
    %v928 = vunpack.c.l.b16 %v540
    %v929 = vunpack.c.h.b16 %v540
    %v930 = vunpack.c.l.b16 %v541
    %v931 = vunpack.c.h.b16 %v541
    %v932 = vunpack.c.l.b16 %v542
    %v933 = vunpack.c.h.b16 %v542
    %v934 = vunpack.c.l.b16 %v543
    %v935 = vunpack.c.h.b16 %v543
    %v936 = vunpack.c.l.b16 %v544
    %v937 = vunpack.c.h.b16 %v544
    %v938 = vunpack.c.l.b16 %v545
    %v939 = vunpack.c.h.b16 %v545
    %v940 = vunpack.c.l.b16 %v546
    %v941 = vunpack.c.h.b16 %v546
    %v942 = vunpack.c.l.b16 %v547
    %v943 = vunpack.c.h.b16 %v547
    %v944 = vunpack.c.l.b16 %v548
    %v945 = vunpack.c.h.b16 %v548
    %v946 = vunpack.c.l.b16 %v549
    %v947 = vunpack.c.h.b16 %v549
    %v948 = vunpack.c.l.b16 %v550
    %v949 = vunpack.c.h.b16 %v550
    %v950 = vunpack.c.l.b16 %v551
    %v951 = vunpack.c.h.b16 %v551
    %v952 = vunpack.c.l.b16 %v552
    %v953 = vunpack.c.h.b16 %v552
    %v954 = vunpack.c.l.b16 %v553
    %v955 = vunpack.c.h.b16 %v553
    %v956 = vunpack.c.l.b16 %v554
    %v957 = vunpack.c.h.b16 %v554
    %v958 = vunpack.c.l.b16 %v555
    %v959 = vunpack.c.h.b16 %v555
    %v960 = vunpack.c.l.b16 %v556
    %v961 = vunpack.c.h.b16 %v556
    %v962 = vunpack.c.l.b16 %v557
    %v963 = vunpack.c.h.b16 %v557
    %v964 = vpack.c.b16 %v712, %v708
    %v965 = vpack.c.b16 %v713, %v709
    %v966 = vpack.c.b16 %v714, %v710
    %v967 = vpack.c.b16 %v715, %v711
    %v968 = vpack.c.b16 %v720, %v716
    %v969 = vpack.c.b16 %v721, %v717
    %v970 = vpack.c.b16 %v722, %v718
    %v971 = vpack.c.b16 %v723, %v719
    %v972 = vpack.c.b16 %v728, %v724
    %v973 = vpack.c.b16 %v729, %v725
    %v974 = vpack.c.b16 %v730, %v726
    %v975 = vpack.c.b16 %v731, %v727
    %v976 = vpack.c.b16 %v736, %v732
    %v977 = vpack.c.b16 %v737, %v733
    %v978 = vpack.c.b16 %v738, %v734
    %v979 = vpack.c.b16 %v739, %v735
    %v980 = vpack.c.b16 %v744, %v740
    %v981 = vpack.c.b16 %v745, %v741
    %v982 = vpack.c.b16 %v746, %v742
    %v983 = vpack.c.b16 %v747, %v743
    %v984 = vpack.c.b16 %v752, %v748
    %v985 = vpack.c.b16 %v753, %v749
    %v986 = vpack.c.b16 %v754, %v750
    %v987 = vpack.c.b16 %v755, %v751
    %v988 = vpack.c.b16 %v760, %v756
    %v989 = vpack.c.b16 %v761, %v757
    %v990 = vpack.c.b16 %v762, %v758
    %v991 = vpack.c.b16 %v763, %v759
    %v992 = vpack.c.b16 %v768, %v764
    %v993 = vpack.c.b16 %v769, %v765
    %v994 = vpack.c.b16 %v770, %v766
    %v995 = vpack.c.b16 %v771, %v767
    %v996 = vpack.c.b16 %v776, %v772
    %v997 = vpack.c.b16 %v777, %v773
    %v998 = vpack.c.b16 %v778, %v774
    %v999 = vpack.c.b16 %v779, %v775
    %v1000 = vpack.c.b16 %v784, %v780
    %v1001 = vpack.c.b16 %v785, %v781
    %v1002 = vpack.c.b16 %v786, %v782
    %v1003 = vpack.c.b16 %v787, %v783
    %v1004 = vpack.c.b16 %v792, %v788
    %v1005 = vpack.c.b16 %v793, %v789
    %v1006 = vpack.c.b16 %v794, %v790
    %v1007 = vpack.c.b16 %v795, %v791
    %v1008 = vpack.c.b16 %v800, %v796
    %v1009 = vpack.c.b16 %v801, %v797
    %v1010 = vpack.c.b16 %v802, %v798
    %v1011 = vpack.c.b16 %v803, %v799
    %v1012 = vpack.c.b16 %v808, %v804
    %v1013 = vpack.c.b16 %v809, %v805
    %v1014 = vpack.c.b16 %v810, %v806
    %v1015 = vpack.c.b16 %v811, %v807
    %v1016 = vpack.c.b16 %v816, %v812
    %v1017 = vpack.c.b16 %v817, %v813
    %v1018 = vpack.c.b16 %v818, %v814
    %v1019 = vpack.c.b16 %v819, %v815
    %v1020 = vpack.c.b16 %v824, %v820
    %v1021 = vpack.c.b16 %v825, %v821
    %v1022 = vpack.c.b16 %v826, %v822
    %v1023 = vpack.c.b16 %v827, %v823
    %v1024 = vpack.c.b16 %v832, %v828
    %v1025 = vpack.c.b16 %v833, %v829
    %v1026 = vpack.c.b16 %v834, %v830
    %v1027 = vpack.c.b16 %v835, %v831
    %v1028 = vpack.c.b16 %v840, %v836
    %v1029 = vpack.c.b16 %v841, %v837
    %v1030 = vpack.c.b16 %v842, %v838
    %v1031 = vpack.c.b16 %v843, %v839
    %v1032 = vpack.c.b16 %v848, %v844
    %v1033 = vpack.c.b16 %v849, %v845
    %v1034 = vpack.c.b16 %v850, %v846
    %v1035 = vpack.c.b16 %v851, %v847
    %v1036 = vpack.c.b16 %v856, %v852
    %v1037 = vpack.c.b16 %v857, %v853
    %v1038 = vpack.c.b16 %v858, %v854
    %v1039 = vpack.c.b16 %v859, %v855
    %v1040 = vpack.c.b16 %v864, %v860
    %v1041 = vpack.c.b16 %v865, %v861
    %v1042 = vpack.c.b16 %v866, %v862
    %v1043 = vpack.c.b16 %v867, %v863
    %v1044 = vpack.c.b16 %v872, %v868
    %v1045 = vpack.c.b16 %v873, %v869
    %v1046 = vpack.c.b16 %v874, %v870
    %v1047 = vpack.c.b16 %v875, %v871
    %v1048 = vpack.c.b16 %v880, %v876
    %v1049 = vpack.c.b16 %v881, %v877
    %v1050 = vpack.c.b16 %v882, %v878
    %v1051 = vpack.c.b16 %v883, %v879
    %v1052 = vpack.c.b16 %v888, %v884
    %v1053 = vpack.c.b16 %v889, %v885
    %v1054 = vpack.c.b16 %v890, %v886
    %v1055 = vpack.c.b16 %v891, %v887
    %v1056 = vpack.c.b16 %v896, %v892
    %v1057 = vpack.c.b16 %v897, %v893
    %v1058 = vpack.c.b16 %v898, %v894
    %v1059 = vpack.c.b16 %v899, %v895
    %v1060 = vpack.c.b16 %v904, %v900
    %v1061 = vpack.c.b16 %v905, %v901
    %v1062 = vpack.c.b16 %v906, %v902
    %v1063 = vpack.c.b16 %v907, %v903
    %v1064 = vpack.c.b16 %v912, %v908
    %v1065 = vpack.c.b16 %v913, %v909
    %v1066 = vpack.c.b16 %v914, %v910
    %v1067 = vpack.c.b16 %v915, %v911
    %v1068 = vpack.c.b16 %v920, %v916
    %v1069 = vpack.c.b16 %v921, %v917
    %v1070 = vpack.c.b16 %v922, %v918
    %v1071 = vpack.c.b16 %v923, %v919
    %v1072 = vpack.c.b16 %v928, %v924
    %v1073 = vpack.c.b16 %v929, %v925
    %v1074 = vpack.c.b16 %v930, %v926
    %v1075 = vpack.c.b16 %v931, %v927
    %v1076 = vpack.c.b16 %v936, %v932
    %v1077 = vpack.c.b16 %v937, %v933
    %v1078 = vpack.c.b16 %v938, %v934
    %v1079 = vpack.c.b16 %v939, %v935
    %v1080 = vpack.c.b16 %v944, %v940
    %v1081 = vpack.c.b16 %v945, %v941
    %v1082 = vpack.c.b16 %v946, %v942
    %v1083 = vpack.c.b16 %v947, %v943
    %v1084 = vpack.c.b16 %v952, %v948
    %v1085 = vpack.c.b16 %v953, %v949
    %v1086 = vpack.c.b16 %v954, %v950
    %v1087 = vpack.c.b16 %v955, %v951
    %v1088 = vpack.c.b16 %v960, %v956
    %v1089 = vpack.c.b16 %v961, %v957
    %v1090 = vpack.c.b16 %v962, %v958
    %v1091 = vpack.c.b16 %v963, %v959
    %1220 = vmatprep.subr.bf16.mxu0 %v965
    %1221 = vmatpush1.bf16.msra.mxu0 %v964
    %1222 = vmatprep.subr.bf16.mxu0 %v969
    %1223 = vmatpush1.bf16.msra.mxu0 %v968
    %1224 = vmatprep.subr.bf16.mxu0 %v973
    %1225 = vmatpush1.bf16.msra.mxu0 %v972
    %1226 = vmatprep.subr.bf16.mxu0 %v977
    %1227 = vmatpush1.bf16.msra.mxu0 %v976
    %1228 = vmatprep.subr.bf16.mxu0 %v981
    %1229 = vmatpush1.bf16.msra.mxu0 %v980
    %1230 = vmatprep.subr.bf16.mxu0 %v985
    %1231 = vmatpush1.bf16.msra.mxu0 %v984
    %1232 = vmatprep.subr.bf16.mxu0 %v989
    %1233 = vmatpush1.bf16.msra.mxu0 %v988
    %1234 = vmatprep.subr.bf16.mxu0 %v993
    %1235 = vmatpush1.bf16.msra.mxu0 %v992
    %1236 = vmatprep.subr.bf16.mxu0 %v997
    %1237 = vmatpush1.bf16.msra.mxu0 %v996
    %1238 = vmatprep.subr.bf16.mxu0 %v1001
    %1239 = vmatpush1.bf16.msra.mxu0 %v1000
    %1240 = vmatprep.subr.bf16.mxu0 %v1005
    %1241 = vmatpush1.bf16.msra.mxu0 %v1004
    %1242 = vmatprep.subr.bf16.mxu0 %v1009
    %1243 = vmatpush1.bf16.msra.mxu0 %v1008
    %1244 = vmatprep.subr.bf16.mxu0 %v1013
    %1245 = vmatpush1.bf16.msra.mxu0 %v1012
    %1246 = vmatprep.subr.bf16.mxu0 %v1017
    %1247 = vmatpush1.bf16.msra.mxu0 %v1016
    %1248 = vmatprep.subr.bf16.mxu0 %v1021
    %1249 = vmatpush1.bf16.msra.mxu0 %v1020
    %1250 = vmatprep.subr.bf16.mxu0 %v1025
    %1251 = vmatpush1.bf16.msra.mxu0 %v1024
    %1252 = vmatprep.mubr.bf16.mxu0 %v427
    %1253 = vmatmul.mubr.bf16.gmra.mrb[0].mxu0 %v426
    %v1254 = vpop.f32.mrb[0].mxu0
    %v1255 = vadd.f32 %v563, %v1254
    %v1256 = vpop.f32.mrb[0].mxu0
    %v1257 = vadd.f32 %v567, %v1256
    %v1258 = vpop.f32.mrb[0].mxu0
    %v1259 = vadd.f32 %v563, %v1258
    %v1260 = vpop.f32.mrb[0].mxu0
    %v1261 = vadd.f32 %v567, %v1260
    %1262 = vdwg.mxu0
    %1263 = vmatprep.subr.bf16.mxu0 %v1029
    %1264 = vmatpush1.bf16.msra.mxu0 %v1028
    %1265 = vmatprep.subr.bf16.mxu0 %v1033
    %1266 = vmatpush1.bf16.msra.mxu0 %v1032
    %1267 = vmatprep.subr.bf16.mxu0 %v1037
    %1268 = vmatpush1.bf16.msra.mxu0 %v1036
    %1269 = vmatprep.subr.bf16.mxu0 %v1041
    %1270 = vmatpush1.bf16.msra.mxu0 %v1040
    %1271 = vmatprep.subr.bf16.mxu0 %v1045
    %1272 = vmatpush1.bf16.msra.mxu0 %v1044
    %1273 = vmatprep.subr.bf16.mxu0 %v1049
    %1274 = vmatpush1.bf16.msra.mxu0 %v1048
    %1275 = vmatprep.subr.bf16.mxu0 %v1053
    %1276 = vmatpush1.bf16.msra.mxu0 %v1052
    %1277 = vmatprep.subr.bf16.mxu0 %v1057
    %1278 = vmatpush1.bf16.msra.mxu0 %v1056
    %1279 = vmatprep.subr.bf16.mxu0 %v1061
    %1280 = vmatpush1.bf16.msra.mxu0 %v1060
    %1281 = vmatprep.subr.bf16.mxu0 %v1065
    %1282 = vmatpush1.bf16.msra.mxu0 %v1064
    %1283 = vmatprep.subr.bf16.mxu0 %v1069
    %1284 = vmatpush1.bf16.msra.mxu0 %v1068
    %1285 = vmatprep.subr.bf16.mxu0 %v1073
    %1286 = vmatpush1.bf16.msra.mxu0 %v1072
    %1287 = vmatprep.subr.bf16.mxu0 %v1077
    %1288 = vmatpush1.bf16.msra.mxu0 %v1076
    %1289 = vmatprep.subr.bf16.mxu0 %v1081
    %1290 = vmatpush1.bf16.msra.mxu0 %v1080
    %1291 = vmatprep.subr.bf16.mxu0 %v1085
    %1292 = vmatpush1.bf16.msra.mxu0 %v1084
    %1293 = vmatprep.subr.bf16.mxu0 %v1089
    %1294 = vmatpush1.bf16.msra.mxu0 %v1088
    %1295 = vmatprep.mubr.bf16.mxu0 %v429
    %1296 = vmatmul.mubr.bf16.gmra.mrb[0].mxu0 %v428
    %v1297 = vpop.f32.mrb[0].mxu0
    %v1298 = vadd.f32 %v1255, %v1297
    %v1299 = vpop.f32.mrb[0].mxu0
    %v1300 = vadd.f32 %v1257, %v1299
    %v1301 = vpop.f32.mrb[0].mxu0
    %v1302 = vadd.f32 %v1259, %v1301
    %v1303 = vpop.f32.mrb[0].mxu0
    %v1304 = vadd.f32 %v1261, %v1303
    %1305 = vdwg.mxu0
    %1306 = vmatprep.subr.bf16.mxu0 %v967
    %1307 = vmatpush1.bf16.msra.mxu0 %v966
    %1308 = vmatprep.subr.bf16.mxu0 %v971
    %1309 = vmatpush1.bf16.msra.mxu0 %v970
    %1310 = vmatprep.subr.bf16.mxu0 %v975
    %1311 = vmatpush1.bf16.msra.mxu0 %v974
    %1312 = vmatprep.subr.bf16.mxu0 %v979
    %1313 = vmatpush1.bf16.msra.mxu0 %v978
    %1314 = vmatprep.subr.bf16.mxu0 %v983
    %1315 = vmatpush1.bf16.msra.mxu0 %v982
    %1316 = vmatprep.subr.bf16.mxu0 %v987
    %1317 = vmatpush1.bf16.msra.mxu0 %v986
    %1318 = vmatprep.subr.bf16.mxu0 %v991
    %1319 = vmatpush1.bf16.msra.mxu0 %v990
    %1320 = vmatprep.subr.bf16.mxu0 %v995
    %1321 = vmatpush1.bf16.msra.mxu0 %v994
    %1322 = vmatprep.subr.bf16.mxu0 %v999
    %1323 = vmatpush1.bf16.msra.mxu0 %v998
    %1324 = vmatprep.subr.bf16.mxu0 %v1003
    %1325 = vmatpush1.bf16.msra.mxu0 %v1002
    %1326 = vmatprep.subr.bf16.mxu0 %v1007
    %1327 = vmatpush1.bf16.msra.mxu0 %v1006
    %1328 = vmatprep.subr.bf16.mxu0 %v1011
    %1329 = vmatpush1.bf16.msra.mxu0 %v1010
    %1330 = vmatprep.subr.bf16.mxu0 %v1015
    %1331 = vmatpush1.bf16.msra.mxu0 %v1014
    %1332 = vmatprep.subr.bf16.mxu0 %v1019
    %1333 = vmatpush1.bf16.msra.mxu0 %v1018
    %1334 = vmatprep.subr.bf16.mxu0 %v1023
    %1335 = vmatpush1.bf16.msra.mxu0 %v1022
    %1336 = vmatprep.subr.bf16.mxu0 %v1027
    %1337 = vmatpush1.bf16.msra.mxu0 %v1026
    %1338 = vmatprep.mubr.bf16.mxu0 %v427
    %1339 = vmatmul.mubr.bf16.gmra.mrb[0].mxu0 %v426
    %v1340 = vpop.f32.mrb[0].mxu0
    %v1341 = vadd.f32 %v571, %v1340
    %v1342 = vpop.f32.mrb[0].mxu0
    %v1343 = vadd.f32 %v575, %v1342
    %v1344 = vpop.f32.mrb[0].mxu0
    %v1345 = vadd.f32 %v571, %v1344
    %v1346 = vpop.f32.mrb[0].mxu0
    %v1347 = vadd.f32 %v575, %v1346
    %1348 = vdwg.mxu0
    %1349 = vmatprep.subr.bf16.mxu0 %v1031
    %1350 = vmatpush1.bf16.msra.mxu0 %v1030
    %1351 = vmatprep.subr.bf16.mxu0 %v1035
    %1352 = vmatpush1.bf16.msra.mxu0 %v1034
    %1353 = vmatprep.subr.bf16.mxu0 %v1039
    %1354 = vmatpush1.bf16.msra.mxu0 %v1038
    %1355 = vmatprep.subr.bf16.mxu0 %v1043
    %1356 = vmatpush1.bf16.msra.mxu0 %v1042
    %1357 = vmatprep.subr.bf16.mxu0 %v1047
    %1358 = vmatpush1.bf16.msra.mxu0 %v1046
    %1359 = vmatprep.subr.bf16.mxu0 %v1051
    %1360 = vmatpush1.bf16.msra.mxu0 %v1050
    %1361 = vmatprep.subr.bf16.mxu0 %v1055
    %1362 = vmatpush1.bf16.msra.mxu0 %v1054
    %1363 = vmatprep.subr.bf16.mxu0 %v1059
    %1364 = vmatpush1.bf16.msra.mxu0 %v1058
    %1365 = vmatprep.subr.bf16.mxu0 %v1063
    %1366 = vmatpush1.bf16.msra.mxu0 %v1062
    %1367 = vmatprep.subr.bf16.mxu0 %v1067
    %1368 = vmatpush1.bf16.msra.mxu0 %v1066
    %1369 = vmatprep.subr.bf16.mxu0 %v1071
    %1370 = vmatpush1.bf16.msra.mxu0 %v1070
    %1371 = vmatprep.subr.bf16.mxu0 %v1075
    %1372 = vmatpush1.bf16.msra.mxu0 %v1074
    %1373 = vmatprep.subr.bf16.mxu0 %v1079
    %1374 = vmatpush1.bf16.msra.mxu0 %v1078
    %1375 = vmatprep.subr.bf16.mxu0 %v1083
    %1376 = vmatpush1.bf16.msra.mxu0 %v1082
    %1377 = vmatprep.subr.bf16.mxu0 %v1087
    %1378 = vmatpush1.bf16.msra.mxu0 %v1086
    %1379 = vmatprep.subr.bf16.mxu0 %v1091
    %1380 = vmatpush1.bf16.msra.mxu0 %v1090
    %1381 = vmatprep.mubr.bf16.mxu0 %v429
    %1382 = vmatmul.mubr.bf16.gmra.mrb[0].mxu0 %v428
    %v1383 = vpop.f32.mrb[0].mxu0
    %v1384 = vadd.f32 %v1341, %v1383
    %v1385 = vpop.f32.mrb[0].mxu0
    %v1386 = vadd.f32 %v1343, %v1385
    %v1387 = vpop.f32.mrb[0].mxu0
    %v1388 = vadd.f32 %v1345, %v1387
    %v1389 = vpop.f32.mrb[0].mxu0
    %v1390 = vadd.f32 %v1347, %v1389
    %1391 = vdwg.mxu0
    %v1392 = vmax.f32 %v1298, 0.0
    %v1393 = vmax.f32 %v1300, 0.0
    %v1394 = vmax.f32 %v1384, 0.0
    %v1395 = vmax.f32 %v1386, 0.0
    %v1396 = vmax.f32 %v1302, 0.0
    %v1397 = vmax.f32 %v1304, 0.0
    %v1398 = vmax.f32 %v1388, 0.0
    %v1399 = vmax.f32 %v1390, 0.0
    %v1400 = vpack.c.bf16 %v1396, %v1392
    %v1401 = vpack.c.bf16 %v1397, %v1393
    %v1402 = vpack.c.bf16 %v1398, %v1394
    %v1403 = vpack.c.bf16 %v1399, %v1395
    %v1404 = vld [vmem:[#allocation9] sm:$0xff]
    %v1405 = vld [vmem:[#allocation9 + $0x8] sm:$0xff]
    %v1406 = vld [vmem:[#allocation9 + $0x10] sm:$0xff]
    %v1407 = vld [vmem:[#allocation9 + $0x18] sm:$0xff]
    %v1408 = vld [vmem:[#allocation9 + $0x20] sm:$0xff]
    %v1409 = vld [vmem:[#allocation9 + $0x28] sm:$0xff]
    %v1410 = vld [vmem:[#allocation9 + $0x30] sm:$0xff]
    %v1411 = vld [vmem:[#allocation9 + $0x38] sm:$0xff]
    %v1412 = vld [vmem:[#allocation9 + $0x40] sm:$0xff]
    %v1413 = vld [vmem:[#allocation9 + $0x48] sm:$0xff]
    %v1414 = vld [vmem:[#allocation9 + $0x50] sm:$0xff]
    %v1415 = vld [vmem:[#allocation9 + $0x58] sm:$0xff]
    %v1416 = vld [vmem:[#allocation9 + $0x60] sm:$0xff]
    %v1417 = vld [vmem:[#allocation9 + $0x68] sm:$0xff]
    %v1418 = vld [vmem:[#allocation9 + $0x70] sm:$0xff]
    %v1419 = vld [vmem:[#allocation9 + $0x78] sm:$0xff]
    %v1420 = vld [vmem:[#allocation9 + $0x80] sm:$0xff]
    %v1421 = vld [vmem:[#allocation9 + $0x88] sm:$0xff]
    %v1422 = vld [vmem:[#allocation9 + $0x90] sm:$0xff]
    %v1423 = vld [vmem:[#allocation9 + $0x98] sm:$0xff]
    %v1424 = vld [vmem:[#allocation9 + $0xa0] sm:$0xff]
    %v1425 = vld [vmem:[#allocation9 + $0xa8] sm:$0xff]
    %v1426 = vld [vmem:[#allocation9 + $0xb0] sm:$0xff]
    %v1427 = vld [vmem:[#allocation9 + $0xb8] sm:$0xff]
    %v1428 = vld [vmem:[#allocation9 + $0xc0] sm:$0xff]
    %v1429 = vld [vmem:[#allocation9 + $0xc8] sm:$0xff]
    %v1430 = vld [vmem:[#allocation9 + $0xd0] sm:$0xff]
    %v1431 = vld [vmem:[#allocation9 + $0xd8] sm:$0xff]
    %v1432 = vld [vmem:[#allocation9 + $0xe0] sm:$0xff]
    %v1433 = vld [vmem:[#allocation9 + $0xe8] sm:$0xff]
    %v1434 = vld [vmem:[#allocation9 + $0xf0] sm:$0xff]
    %v1435 = vld [vmem:[#allocation9 + $0xf8] sm:$0xff]
    %v1436 = vld [vmem:[#allocation9 + $0x100] sm:$0xff]
    %v1437 = vld [vmem:[#allocation9 + $0x108] sm:$0xff]
    %v1438 = vld [vmem:[#allocation9 + $0x110] sm:$0xff]
    %v1439 = vld [vmem:[#allocation9 + $0x118] sm:$0xff]
    %v1440 = vld [vmem:[#allocation9 + $0x120] sm:$0xff]
    %v1441 = vld [vmem:[#allocation9 + $0x128] sm:$0xff]
    %v1442 = vld [vmem:[#allocation9 + $0x130] sm:$0xff]
    %v1443 = vld [vmem:[#allocation9 + $0x138] sm:$0xff]
    %v1444 = vld [vmem:[#allocation9 + $0x140] sm:$0xff]
    %v1445 = vld [vmem:[#allocation9 + $0x148] sm:$0xff]
    %v1446 = vld [vmem:[#allocation9 + $0x150] sm:$0xff]
    %v1447 = vld [vmem:[#allocation9 + $0x158] sm:$0xff]
    %v1448 = vld [vmem:[#allocation9 + $0x160] sm:$0xff]
    %v1449 = vld [vmem:[#allocation9 + $0x168] sm:$0xff]
    %v1450 = vld [vmem:[#allocation9 + $0x170] sm:$0xff]
    %v1451 = vld [vmem:[#allocation9 + $0x178] sm:$0xff]
    %v1452 = vld [vmem:[#allocation9 + $0x180] sm:$0xff]
    %v1453 = vld [vmem:[#allocation9 + $0x188] sm:$0xff]
    %v1454 = vld [vmem:[#allocation9 + $0x190] sm:$0xff]
    %v1455 = vld [vmem:[#allocation9 + $0x198] sm:$0xff]
    %v1456 = vld [vmem:[#allocation9 + $0x1a0] sm:$0xff]
    %v1457 = vld [vmem:[#allocation9 + $0x1a8] sm:$0xff]
    %v1458 = vld [vmem:[#allocation9 + $0x1b0] sm:$0xff]
    %v1459 = vld [vmem:[#allocation9 + $0x1b8] sm:$0xff]
    %v1460 = vld [vmem:[#allocation9 + $0x1c0] sm:$0xff]
    %v1461 = vld [vmem:[#allocation9 + $0x1c8] sm:$0xff]
    %v1462 = vld [vmem:[#allocation9 + $0x1d0] sm:$0xff]
    %v1463 = vld [vmem:[#allocation9 + $0x1d8] sm:$0xff]
    %v1464 = vld [vmem:[#allocation9 + $0x1e0] sm:$0xff]
    %v1465 = vld [vmem:[#allocation9 + $0x1e8] sm:$0xff]
    %v1466 = vld [vmem:[#allocation9 + $0x1f0] sm:$0xff]
    %v1467 = vld [vmem:[#allocation9 + $0x1f8] sm:$0xff]
    %v1468 = vld [vmem:[%s6] sm:$0x3]
    %v1470 = vlaneseq
    %v1471 = vshrl.u32 %v1470, 7
    %v1472 = vsub.s32 0, %v1471
    %v1473 = vrot.slane %v1468, %v1472
    %v1474 = vlaneseq
    %v1475 = vshrl.u32 %v1474, 7
    %v1476 = vsub.s32 1, %v1475
    %v1477 = vrot.slane %v1468, %v1476
    %v1544 = vunpack.c.l.b16 %v1404
    %v1545 = vunpack.c.h.b16 %v1404
    %v1546 = vunpack.c.l.b16 %v1405
    %v1547 = vunpack.c.h.b16 %v1405
    %v1548 = vunpack.c.l.b16 %v1406
    %v1549 = vunpack.c.h.b16 %v1406
    %v1550 = vunpack.c.l.b16 %v1407
    %v1551 = vunpack.c.h.b16 %v1407
    %v1552 = vunpack.c.l.b16 %v1408
    %v1553 = vunpack.c.h.b16 %v1408
    %v1554 = vunpack.c.l.b16 %v1409
    %v1555 = vunpack.c.h.b16 %v1409
    %v1556 = vunpack.c.l.b16 %v1410
    %v1557 = vunpack.c.h.b16 %v1410
    %v1558 = vunpack.c.l.b16 %v1411
    %v1559 = vunpack.c.h.b16 %v1411
    %v1560 = vunpack.c.l.b16 %v1412
    %v1561 = vunpack.c.h.b16 %v1412
    %v1562 = vunpack.c.l.b16 %v1413
    %v1563 = vunpack.c.h.b16 %v1413
    %v1564 = vunpack.c.l.b16 %v1414
    %v1565 = vunpack.c.h.b16 %v1414
    %v1566 = vunpack.c.l.b16 %v1415
    %v1567 = vunpack.c.h.b16 %v1415
    %v1568 = vunpack.c.l.b16 %v1416
    %v1569 = vunpack.c.h.b16 %v1416
    %v1570 = vunpack.c.l.b16 %v1417
    %v1571 = vunpack.c.h.b16 %v1417
    %v1572 = vunpack.c.l.b16 %v1418
    %v1573 = vunpack.c.h.b16 %v1418
    %v1574 = vunpack.c.l.b16 %v1419
    %v1575 = vunpack.c.h.b16 %v1419
    %v1576 = vunpack.c.l.b16 %v1420
    %v1577 = vunpack.c.h.b16 %v1420
    %v1578 = vunpack.c.l.b16 %v1421
    %v1579 = vunpack.c.h.b16 %v1421
    %v1580 = vunpack.c.l.b16 %v1422
    %v1581 = vunpack.c.h.b16 %v1422
    %v1582 = vunpack.c.l.b16 %v1423
    %v1583 = vunpack.c.h.b16 %v1423
    %v1584 = vunpack.c.l.b16 %v1424
    %v1585 = vunpack.c.h.b16 %v1424
    %v1586 = vunpack.c.l.b16 %v1425
    %v1587 = vunpack.c.h.b16 %v1425
    %v1588 = vunpack.c.l.b16 %v1426
    %v1589 = vunpack.c.h.b16 %v1426
    %v1590 = vunpack.c.l.b16 %v1427
    %v1591 = vunpack.c.h.b16 %v1427
    %v1592 = vunpack.c.l.b16 %v1428
    %v1593 = vunpack.c.h.b16 %v1428
    %v1594 = vunpack.c.l.b16 %v1429
    %v1595 = vunpack.c.h.b16 %v1429
    %v1596 = vunpack.c.l.b16 %v1430
    %v1597 = vunpack.c.h.b16 %v1430
    %v1598 = vunpack.c.l.b16 %v1431
    %v1599 = vunpack.c.h.b16 %v1431
    %v1600 = vunpack.c.l.b16 %v1432
    %v1601 = vunpack.c.h.b16 %v1432
    %v1602 = vunpack.c.l.b16 %v1433
    %v1603 = vunpack.c.h.b16 %v1433
    %v1604 = vunpack.c.l.b16 %v1434
    %v1605 = vunpack.c.h.b16 %v1434
    %v1606 = vunpack.c.l.b16 %v1435
    %v1607 = vunpack.c.h.b16 %v1435
    %v1608 = vunpack.c.l.b16 %v1436
    %v1609 = vunpack.c.h.b16 %v1436
    %v1610 = vunpack.c.l.b16 %v1437
    %v1611 = vunpack.c.h.b16 %v1437
    %v1612 = vunpack.c.l.b16 %v1438
    %v1613 = vunpack.c.h.b16 %v1438
    %v1614 = vunpack.c.l.b16 %v1439
    %v1615 = vunpack.c.h.b16 %v1439
    %v1616 = vunpack.c.l.b16 %v1440
    %v1617 = vunpack.c.h.b16 %v1440
    %v1618 = vunpack.c.l.b16 %v1441
    %v1619 = vunpack.c.h.b16 %v1441
    %v1620 = vunpack.c.l.b16 %v1442
    %v1621 = vunpack.c.h.b16 %v1442
    %v1622 = vunpack.c.l.b16 %v1443
    %v1623 = vunpack.c.h.b16 %v1443
    %v1624 = vunpack.c.l.b16 %v1444
    %v1625 = vunpack.c.h.b16 %v1444
    %v1626 = vunpack.c.l.b16 %v1445
    %v1627 = vunpack.c.h.b16 %v1445
    %v1628 = vunpack.c.l.b16 %v1446
    %v1629 = vunpack.c.h.b16 %v1446
    %v1630 = vunpack.c.l.b16 %v1447
    %v1631 = vunpack.c.h.b16 %v1447
    %v1632 = vunpack.c.l.b16 %v1448
    %v1633 = vunpack.c.h.b16 %v1448
    %v1634 = vunpack.c.l.b16 %v1449
    %v1635 = vunpack.c.h.b16 %v1449
    %v1636 = vunpack.c.l.b16 %v1450
    %v1637 = vunpack.c.h.b16 %v1450
    %v1638 = vunpack.c.l.b16 %v1451
    %v1639 = vunpack.c.h.b16 %v1451
    %v1640 = vunpack.c.l.b16 %v1452
    %v1641 = vunpack.c.h.b16 %v1452
    %v1642 = vunpack.c.l.b16 %v1453
    %v1643 = vunpack.c.h.b16 %v1453
    %v1644 = vunpack.c.l.b16 %v1454
    %v1645 = vunpack.c.h.b16 %v1454
    %v1646 = vunpack.c.l.b16 %v1455
    %v1647 = vunpack.c.h.b16 %v1455
    %v1648 = vunpack.c.l.b16 %v1456
    %v1649 = vunpack.c.h.b16 %v1456
    %v1650 = vunpack.c.l.b16 %v1457
    %v1651 = vunpack.c.h.b16 %v1457
    %v1652 = vunpack.c.l.b16 %v1458
    %v1653 = vunpack.c.h.b16 %v1458
    %v1654 = vunpack.c.l.b16 %v1459
    %v1655 = vunpack.c.h.b16 %v1459
    %v1656 = vunpack.c.l.b16 %v1460
    %v1657 = vunpack.c.h.b16 %v1460
    %v1658 = vunpack.c.l.b16 %v1461
    %v1659 = vunpack.c.h.b16 %v1461
    %v1660 = vunpack.c.l.b16 %v1462
    %v1661 = vunpack.c.h.b16 %v1462
    %v1662 = vunpack.c.l.b16 %v1463
    %v1663 = vunpack.c.h.b16 %v1463
    %v1664 = vunpack.c.l.b16 %v1464
    %v1665 = vunpack.c.h.b16 %v1464
    %v1666 = vunpack.c.l.b16 %v1465
    %v1667 = vunpack.c.h.b16 %v1465
    %v1668 = vunpack.c.l.b16 %v1466
    %v1669 = vunpack.c.h.b16 %v1466
    %v1670 = vunpack.c.l.b16 %v1467
    %v1671 = vunpack.c.h.b16 %v1467
    %v1672 = vpack.c.b16 %v1546, %v1544
    %v1673 = vpack.c.b16 %v1547, %v1545
    %v1674 = vpack.c.b16 %v1550, %v1548
    %v1675 = vpack.c.b16 %v1551, %v1549
    %v1676 = vpack.c.b16 %v1554, %v1552
    %v1677 = vpack.c.b16 %v1555, %v1553
    %v1678 = vpack.c.b16 %v1558, %v1556
    %v1679 = vpack.c.b16 %v1559, %v1557
    %v1680 = vpack.c.b16 %v1562, %v1560
    %v1681 = vpack.c.b16 %v1563, %v1561
    %v1682 = vpack.c.b16 %v1566, %v1564
    %v1683 = vpack.c.b16 %v1567, %v1565
    %v1684 = vpack.c.b16 %v1570, %v1568
    %v1685 = vpack.c.b16 %v1571, %v1569
    %v1686 = vpack.c.b16 %v1574, %v1572
    %v1687 = vpack.c.b16 %v1575, %v1573
    %v1688 = vpack.c.b16 %v1578, %v1576
    %v1689 = vpack.c.b16 %v1579, %v1577
    %v1690 = vpack.c.b16 %v1582, %v1580
    %v1691 = vpack.c.b16 %v1583, %v1581
    %v1692 = vpack.c.b16 %v1586, %v1584
    %v1693 = vpack.c.b16 %v1587, %v1585
    %v1694 = vpack.c.b16 %v1590, %v1588
    %v1695 = vpack.c.b16 %v1591, %v1589
    %v1696 = vpack.c.b16 %v1594, %v1592
    %v1697 = vpack.c.b16 %v1595, %v1593
    %v1698 = vpack.c.b16 %v1598, %v1596
    %v1699 = vpack.c.b16 %v1599, %v1597
    %v1700 = vpack.c.b16 %v1602, %v1600
    %v1701 = vpack.c.b16 %v1603, %v1601
    %v1702 = vpack.c.b16 %v1606, %v1604
    %v1703 = vpack.c.b16 %v1607, %v1605
    %v1704 = vpack.c.b16 %v1610, %v1608
    %v1705 = vpack.c.b16 %v1611, %v1609
    %v1706 = vpack.c.b16 %v1614, %v1612
    %v1707 = vpack.c.b16 %v1615, %v1613
    %v1708 = vpack.c.b16 %v1618, %v1616
    %v1709 = vpack.c.b16 %v1619, %v1617
    %v1710 = vpack.c.b16 %v1622, %v1620
    %v1711 = vpack.c.b16 %v1623, %v1621
    %v1712 = vpack.c.b16 %v1626, %v1624
    %v1713 = vpack.c.b16 %v1627, %v1625
    %v1714 = vpack.c.b16 %v1630, %v1628
    %v1715 = vpack.c.b16 %v1631, %v1629
    %v1716 = vpack.c.b16 %v1634, %v1632
    %v1717 = vpack.c.b16 %v1635, %v1633
    %v1718 = vpack.c.b16 %v1638, %v1636
    %v1719 = vpack.c.b16 %v1639, %v1637
    %v1720 = vpack.c.b16 %v1642, %v1640
    %v1721 = vpack.c.b16 %v1643, %v1641
    %v1722 = vpack.c.b16 %v1646, %v1644
    %v1723 = vpack.c.b16 %v1647, %v1645
    %v1724 = vpack.c.b16 %v1650, %v1648
    %v1725 = vpack.c.b16 %v1651, %v1649
    %v1726 = vpack.c.b16 %v1654, %v1652
    %v1727 = vpack.c.b16 %v1655, %v1653
    %v1728 = vpack.c.b16 %v1658, %v1656
    %v1729 = vpack.c.b16 %v1659, %v1657
    %v1730 = vpack.c.b16 %v1662, %v1660
    %v1731 = vpack.c.b16 %v1663, %v1661
    %v1732 = vpack.c.b16 %v1666, %v1664
    %v1733 = vpack.c.b16 %v1667, %v1665
    %v1734 = vpack.c.b16 %v1670, %v1668
    %v1735 = vpack.c.b16 %v1671, %v1669
    %1800 = vmatprep.subr.bf16.mxu0 %v1673
    %1801 = vmatpush1.bf16.msra.mxu0 %v1672
    %1802 = vmatprep.subr.bf16.mxu0 %v1675
    %1803 = vmatpush1.bf16.msra.mxu0 %v1674
    %1804 = vmatprep.subr.bf16.mxu0 %v1677
    %1805 = vmatpush1.bf16.msra.mxu0 %v1676
    %1806 = vmatprep.subr.bf16.mxu0 %v1679
    %1807 = vmatpush1.bf16.msra.mxu0 %v1678
    %1808 = vmatprep.subr.bf16.mxu0 %v1681
    %1809 = vmatpush1.bf16.msra.mxu0 %v1680
    %1810 = vmatprep.subr.bf16.mxu0 %v1683
    %1811 = vmatpush1.bf16.msra.mxu0 %v1682
    %1812 = vmatprep.subr.bf16.mxu0 %v1685
    %1813 = vmatpush1.bf16.msra.mxu0 %v1684
    %1814 = vmatprep.subr.bf16.mxu0 %v1687
    %1815 = vmatpush1.bf16.msra.mxu0 %v1686
    %1816 = vmatprep.subr.bf16.mxu0 %v1689
    %1817 = vmatpush1.bf16.msra.mxu0 %v1688
    %1818 = vmatprep.subr.bf16.mxu0 %v1691
    %1819 = vmatpush1.bf16.msra.mxu0 %v1690
    %1820 = vmatprep.subr.bf16.mxu0 %v1693
    %1821 = vmatpush1.bf16.msra.mxu0 %v1692
    %1822 = vmatprep.subr.bf16.mxu0 %v1695
    %1823 = vmatpush1.bf16.msra.mxu0 %v1694
    %1824 = vmatprep.subr.bf16.mxu0 %v1697
    %1825 = vmatpush1.bf16.msra.mxu0 %v1696
    %1826 = vmatprep.subr.bf16.mxu0 %v1699
    %1827 = vmatpush1.bf16.msra.mxu0 %v1698
    %1828 = vmatprep.subr.bf16.mxu0 %v1701
    %1829 = vmatpush1.bf16.msra.mxu0 %v1700
    %1830 = vmatprep.subr.bf16.mxu0 %v1703
    %1831 = vmatpush1.bf16.msra.mxu0 %v1702
    %1832 = vmatprep.mubr.bf16.mxu0 %v1401
    %1833 = vmatmul.mubr.bf16.gmra.mrb[0].mxu0 %v1400
    %v1834 = vpop.f32.mrb[0].mxu0
    %v1835 = vadd.f32 %v1473, %v1834
    %v1836 = vpop.f32.mrb[0].mxu0
    %v1837 = vadd.f32 %v1477, %v1836
    %v1838 = vpop.f32.mrb[0].mxu0
    %v1839 = vadd.f32 %v1473, %v1838
    %v1840 = vpop.f32.mrb[0].mxu0
    %v1841 = vadd.f32 %v1477, %v1840
    %1842 = vdwg.mxu0
    %1843 = vmatprep.subr.bf16.mxu0 %v1705
    %1844 = vmatpush1.bf16.msra.mxu0 %v1704
    %1845 = vmatprep.subr.bf16.mxu0 %v1707
    %1846 = vmatpush1.bf16.msra.mxu0 %v1706
    %1847 = vmatprep.subr.bf16.mxu0 %v1709
    %1848 = vmatpush1.bf16.msra.mxu0 %v1708
    %1849 = vmatprep.subr.bf16.mxu0 %v1711
    %1850 = vmatpush1.bf16.msra.mxu0 %v1710
    %1851 = vmatprep.subr.bf16.mxu0 %v1713
    %1852 = vmatpush1.bf16.msra.mxu0 %v1712
    %1853 = vmatprep.subr.bf16.mxu0 %v1715
    %1854 = vmatpush1.bf16.msra.mxu0 %v1714
    %1855 = vmatprep.subr.bf16.mxu0 %v1717
    %1856 = vmatpush1.bf16.msra.mxu0 %v1716
    %1857 = vmatprep.subr.bf16.mxu0 %v1719
    %1858 = vmatpush1.bf16.msra.mxu0 %v1718
    %1859 = vmatprep.subr.bf16.mxu0 %v1721
    %1860 = vmatpush1.bf16.msra.mxu0 %v1720
    %1861 = vmatprep.subr.bf16.mxu0 %v1723
    %1862 = vmatpush1.bf16.msra.mxu0 %v1722
    %1863 = vmatprep.subr.bf16.mxu0 %v1725
    %1864 = vmatpush1.bf16.msra.mxu0 %v1724
    %1865 = vmatprep.subr.bf16.mxu0 %v1727
    %1866 = vmatpush1.bf16.msra.mxu0 %v1726
    %1867 = vmatprep.subr.bf16.mxu0 %v1729
    %1868 = vmatpush1.bf16.msra.mxu0 %v1728
    %1869 = vmatprep.subr.bf16.mxu0 %v1731
    %1870 = vmatpush1.bf16.msra.mxu0 %v1730
    %1871 = vmatprep.subr.bf16.mxu0 %v1733
    %1872 = vmatpush1.bf16.msra.mxu0 %v1732
    %1873 = vmatprep.subr.bf16.mxu0 %v1735
    %1874 = vmatpush1.bf16.msra.mxu0 %v1734
    %1875 = vmatprep.mubr.bf16.mxu0 %v1403
    %1876 = vmatmul.mubr.bf16.gmra.mrb[0].mxu0 %v1402
    %v1877 = vpop.f32.mrb[0].mxu0
    %v1878 = vadd.f32 %v1835, %v1877
    %v1879 = vpop.f32.mrb[0].mxu0
    %v1880 = vadd.f32 %v1837, %v1879
    %v1881 = vpop.f32.mrb[0].mxu0
    %v1882 = vadd.f32 %v1839, %v1881
    %v1883 = vpop.f32.mrb[0].mxu0
    %v1884 = vadd.f32 %v1841, %v1883
    %1885 = vdwg.mxu0
    %v1886 = vmax.f32 %v1878, 0.0
    %v1887 = vmax.f32 %v1880, 0.0
    %v1888 = vmax.f32 %v1882, 0.0
    %v1889 = vmax.f32 %v1884, 0.0
    %v1890 = vpack.c.bf16 %v1888, %v1886
    %v1891 = vpack.c.bf16 %v1889, %v1887
    %v1892 = vld [vmem:[#allocation11] sm:$0xf]
    %v1893 = vld [vmem:[#allocation11 + $0x4] sm:$0xf]
    %v1894 = vld [vmem:[#allocation11 + $0x8] sm:$0xf]
    %v1895 = vld [vmem:[#allocation11 + $0xc] sm:$0xf]
    %v1896 = vld [vmem:[#allocation11 + $0x10] sm:$0xf]
    %v1897 = vld [vmem:[#allocation11 + $0x14] sm:$0xf]
    %v1898 = vld [vmem:[#allocation11 + $0x18] sm:$0xf]
    %v1899 = vld [vmem:[#allocation11 + $0x1c] sm:$0xf]
    %v1900 = vld [vmem:[#allocation11 + $0x20] sm:$0xf]
    %v1901 = vld [vmem:[#allocation11 + $0x24] sm:$0xf]
    %v1902 = vld [vmem:[#allocation11 + $0x28] sm:$0xf]
    %v1903 = vld [vmem:[#allocation11 + $0x2c] sm:$0xf]
    %v1904 = vld [vmem:[#allocation11 + $0x30] sm:$0xf]
    %v1905 = vld [vmem:[#allocation11 + $0x34] sm:$0xf]
    %v1906 = vld [vmem:[#allocation11 + $0x38] sm:$0xf]
    %v1907 = vld [vmem:[#allocation11 + $0x3c] sm:$0xf]
    %v1908 = vld [vmem:[#allocation11 + $0x40] sm:$0xf]
    %v1909 = vld [vmem:[#allocation11 + $0x44] sm:$0xf]
    %v1910 = vld [vmem:[#allocation11 + $0x48] sm:$0xf]
    %v1911 = vld [vmem:[#allocation11 + $0x4c] sm:$0xf]
    %v1912 = vld [vmem:[#allocation11 + $0x50] sm:$0xf]
    %v1913 = vld [vmem:[#allocation11 + $0x54] sm:$0xf]
    %v1914 = vld [vmem:[#allocation11 + $0x58] sm:$0xf]
    %v1915 = vld [vmem:[#allocation11 + $0x5c] sm:$0xf]
    %v1916 = vld [vmem:[#allocation11 + $0x60] sm:$0xf]
    %v1917 = vld [vmem:[#allocation11 + $0x64] sm:$0xf]
    %v1918 = vld [vmem:[#allocation11 + $0x68] sm:$0xf]
    %v1919 = vld [vmem:[#allocation11 + $0x6c] sm:$0xf]
    %v1920 = vld [vmem:[#allocation11 + $0x70] sm:$0xf]
    %v1921 = vld [vmem:[#allocation11 + $0x74] sm:$0xf]
    %v1922 = vld [vmem:[#allocation11 + $0x78] sm:$0xf]
    %v1923 = vld [vmem:[#allocation11 + $0x7c] sm:$0xf]
    %v1924 = vld [vmem:[%s8] sm:$0x1]
    %v1926 = vlaneseq
    %v1927 = vshrl.u32 %v1926, 7
    %v1928 = vsub.s32 0, %v1927
    %v1929 = vrot.slane %v1924, %v1928
    %v1963 = vunpack.c.l.b16 %v1892
    %v1964 = vunpack.c.l.b16 %v1893
    %v1965 = vunpack.c.l.b16 %v1894
    %v1966 = vunpack.c.l.b16 %v1895
    %v1967 = vunpack.c.l.b16 %v1896
    %v1968 = vunpack.c.l.b16 %v1897
    %v1969 = vunpack.c.l.b16 %v1898
    %v1970 = vunpack.c.l.b16 %v1899
    %v1971 = vunpack.c.l.b16 %v1900
    %v1972 = vunpack.c.l.b16 %v1901
    %v1973 = vunpack.c.l.b16 %v1902
    %v1974 = vunpack.c.l.b16 %v1903
    %v1975 = vunpack.c.l.b16 %v1904
    %v1976 = vunpack.c.l.b16 %v1905
    %v1977 = vunpack.c.l.b16 %v1906
    %v1978 = vunpack.c.l.b16 %v1907
    %v1979 = vunpack.c.l.b16 %v1908
    %v1980 = vunpack.c.l.b16 %v1909
    %v1981 = vunpack.c.l.b16 %v1910
    %v1982 = vunpack.c.l.b16 %v1911
    %v1983 = vunpack.c.l.b16 %v1912
    %v1984 = vunpack.c.l.b16 %v1913
    %v1985 = vunpack.c.l.b16 %v1914
    %v1986 = vunpack.c.l.b16 %v1915
    %v1987 = vunpack.c.l.b16 %v1916
    %v1988 = vunpack.c.l.b16 %v1917
    %v1989 = vunpack.c.l.b16 %v1918
    %v1990 = vunpack.c.l.b16 %v1919
    %v1991 = vunpack.c.l.b16 %v1920
    %v1992 = vunpack.c.l.b16 %v1921
    %v1993 = vunpack.c.l.b16 %v1922
    %v1994 = vunpack.c.l.b16 %v1923
    %v1995 = vpack.c.b16 %v1964, %v1963
    %v1996 = vpack.c.b16 %v1966, %v1965
    %v1997 = vpack.c.b16 %v1968, %v1967
    %v1998 = vpack.c.b16 %v1970, %v1969
    %v1999 = vpack.c.b16 %v1972, %v1971
    %v2000 = vpack.c.b16 %v1974, %v1973
    %v2001 = vpack.c.b16 %v1976, %v1975
    %v2002 = vpack.c.b16 %v1978, %v1977
    %v2003 = vpack.c.b16 %v1980, %v1979
    %v2004 = vpack.c.b16 %v1982, %v1981
    %v2005 = vpack.c.b16 %v1984, %v1983
    %v2006 = vpack.c.b16 %v1986, %v1985
    %v2007 = vpack.c.b16 %v1988, %v1987
    %v2008 = vpack.c.b16 %v1990, %v1989
    %v2009 = vpack.c.b16 %v1992, %v1991
    %v2010 = vpack.c.b16 %v1994, %v1993
    %2027 = vmatprep.subr.bf16.mxu0 0
    %2028 = vmatpush1.bf16.msra.mxu0 %v1995
    %2029 = vmatprep.subr.bf16.mxu0 0
    %2030 = vmatpush1.bf16.msra.mxu0 %v1996
    %2031 = vmatprep.subr.bf16.mxu0 0
    %2032 = vmatpush1.bf16.msra.mxu0 %v1997
    %2033 = vmatprep.subr.bf16.mxu0 0
    %2034 = vmatpush1.bf16.msra.mxu0 %v1998
    %2035 = vmatprep.subr.bf16.mxu0 0
    %2036 = vmatpush1.bf16.msra.mxu0 %v1999
    %2037 = vmatprep.subr.bf16.mxu0 0
    %2038 = vmatpush1.bf16.msra.mxu0 %v2000
    %2039 = vmatprep.subr.bf16.mxu0 0
    %2040 = vmatpush1.bf16.msra.mxu0 %v2001
    %2041 = vmatprep.subr.bf16.mxu0 0
    %2042 = vmatpush1.bf16.msra.mxu0 %v2002
    %2043 = vmatprep.subr.bf16.mxu0 0
    %2044 = vmatpush1.bf16.msra.mxu0 %v2003
    %2045 = vmatprep.subr.bf16.mxu0 0
    %2046 = vmatpush1.bf16.msra.mxu0 %v2004
    %2047 = vmatprep.subr.bf16.mxu0 0
    %2048 = vmatpush1.bf16.msra.mxu0 %v2005
    %2049 = vmatprep.subr.bf16.mxu0 0
    %2050 = vmatpush1.bf16.msra.mxu0 %v2006
    %2051 = vmatprep.subr.bf16.mxu0 0
    %2052 = vmatpush1.bf16.msra.mxu0 %v2007
    %2053 = vmatprep.subr.bf16.mxu0 0
    %2054 = vmatpush1.bf16.msra.mxu0 %v2008
    %2055 = vmatprep.subr.bf16.mxu0 0
    %2056 = vmatpush1.bf16.msra.mxu0 %v2009
    %2057 = vmatprep.subr.bf16.mxu0 0
    %2058 = vmatpush1.bf16.msra.mxu0 %v2010
    %2059 = vmatprep.mubr.bf16.mxu0 %v1891
    %2060 = vmatmul.mubr.bf16.gmra.mrb[0].mxu0 %v1890
    %v2061 = vpop.f32.mrb[0].mxu0
    %v2062 = vadd.f32 %v1929, %v2061
    %v2063 = vpop.f32.mrb[0].mxu0
    %v2064 = vpop.f32.mrb[0].mxu0
    %v2065 = vadd.f32 %v1929, %v2064
    %v2066 = vpop.f32.mrb[0].mxu0
    %2067 = vdwg.mxu0
    %v2068 = vmax.f32 %v2062, 0.0
    %v2069 = vmax.f32 %v2065, 0.0
    %v2070 = vpack.c.bf16 %v2069, %v2068
    %v2071 = vld [vmem:[%s9] sm:$0x1]
    %v2072 = vld [vmem:[#allocation2] sm:$0x1]
    %2074 = vset.pattern.permute.xlu0 0
    %2075 = vperm.xlu0 %2074, %v2072
    %v2076 = vpop.permute.xlu0 %2075
    %v2078 = vlaneseq
    %v2079 = vshrl.u32 %v2078, 7
    %v2080 = vsub.s32 0, %v2079
    %v2081 = vrot.slane %v2076, %v2080
    %2082 = vmatprep.subr.bf16.mxu0 0
    %2083 = vmatpush1.bf16.xpose.msra.mxu0 %v2070
    %2084 = vmatprep.subr.bf16.mxu0 0
    %2085 = vmatpush1.bf16.xpose.msra.mxu0 0
    %2086 = vmatprep.subr.bf16.mxu0 0
    %2087 = vmatpush1.bf16.xpose.msra.mxu0 0
    %2088 = vmatprep.subr.bf16.mxu0 0
    %2089 = vmatpush1.bf16.xpose.msra.mxu0 0
    %2090 = vmatprep.subr.bf16.mxu0 0
    %2091 = vmatpush1.bf16.xpose.msra.mxu0 0
    %2092 = vmatprep.subr.bf16.mxu0 0
    %2093 = vmatpush1.bf16.xpose.msra.mxu0 0
    %2094 = vmatprep.subr.bf16.mxu0 0
    %2095 = vmatpush1.bf16.xpose.msra.mxu0 0
    %2096 = vmatprep.subr.bf16.mxu0 0
    %2097 = vmatpush1.bf16.xpose.msra.mxu0 0
    %2098 = vmatprep.subr.bf16.mxu0 0
    %2099 = vmatpush1.bf16.xpose.msra.mxu0 0
    %2100 = vmatprep.subr.bf16.mxu0 0
    %2101 = vmatpush1.bf16.xpose.msra.mxu0 0
    %2102 = vmatprep.subr.bf16.mxu0 0
    %2103 = vmatpush1.bf16.xpose.msra.mxu0 0
    %2104 = vmatprep.subr.bf16.mxu0 0
    %2105 = vmatpush1.bf16.xpose.msra.mxu0 0
    %2106 = vmatprep.subr.bf16.mxu0 0
    %2107 = vmatpush1.bf16.xpose.msra.mxu0 0
    %2108 = vmatprep.subr.bf16.mxu0 0
    %2109 = vmatpush1.bf16.xpose.msra.mxu0 0
    %2110 = vmatprep.subr.bf16.mxu0 0
    %2111 = vmatpush1.bf16.xpose.msra.mxu0 0
    %2112 = vmatprep.subr.bf16.mxu0 0
    %2113 = vmatpush1.bf16.xpose.msra.mxu0 0
    %2114 = vmatprep.mubr.bf16.mxu0 0
    %2115 = vmatmul.mubr.bf16.gmra.mrb[0].mxu0 %v2071
    %v2116 = vpop.f32.mrb[0].mxu0
    %v2117 = vadd.f32 %v2081, %v2116
    %v2118 = vpop.f32.mrb[0].mxu0
    %v2119 = vpop.f32.mrb[0].mxu0
    %v2120 = vpop.f32.mrb[0].mxu0
    %2121 = vdwg.mxu0
    %vm2122 = vcmask 122880
    %2123 = vst.msk [vmem:[#allocation12] sm:$0x1] %vm2122, %v2117
    // Predicated region
    $region66: #{tpu_custom_call.1} parent=1 // pred_check
      _
    $region67: #{tpu_custom_call.1} parent=1 // pred_check_branch
      %2125 = sbr.rel (0) target = $region69
    $region68: #{tpu_custom_call.1} parent=1 // pred_region
      %s2127 = ssub.s32 16, 16
      %2128 = vsyncadd [#allocation5], %s2127
      %s2130 = sshll.u32 [#allocation12], 4
      %s2131 = int_to_ptr.vmem [resolvable:$true] %s2130
      %2133 = dma.vmem_to_hbm [thread:$0]  %s2131, 16, %s11, [#allocation5]
    $region69: #{tpu_custom_call.1} parent=1 // pred_fallthru
      _
    // Predicated region
    $region70: #{tpu_custom_call.1} parent=1 // pred_check
      _
    $region71: #{tpu_custom_call.1} parent=1 // pred_check_branch
      %2135 = sbr.rel (0) target = $region73
    $region72: #{tpu_custom_call.1} parent=1 // pred_region
      %2136 = dma.done [#allocation5], 16
    $region73: #{tpu_custom_call.1} parent=1 // pred_fallthru
      _
    %2137 = vsyncpa [#allocation4], 1
    %2138 = vsyncpa [#allocation7], 1
    %2139 = vsyncpa [#allocation10], 1
    %2140 = vsyncpa [#allocation5], 1

</llo_original>
